<compile_context>
chip_gen: v7x
topology: tpu7x:2x2x1
jax: 0.10.0
libtpu: 0.0.40
codegen_flags: <defaults>
</compile_context>

<pallas_src>
import functools

import jax
import jax.numpy as jnp
from jax.experimental import pallas as pl
from jax.experimental.pallas import tpu as pltpu

EPS = 1e-5


def _round_up(x, m):
    return (x + m - 1) // m * m


def _conv_accumulate(x, w, *, cin, width, k_h, k_w, m_pad):
    """Valid 2-D conv in transposed layout via KH*KW accumulate matmuls.

    x: [Cin, L]  flat (zero-padded) image tile, f32, VMEM value
    w: [Cout, K] folded conv weight (K = KH*KW*Cin, tap-major / cin-minor), f32
    Returns acc: [Cout, m_pad] f32.  Column c encodes (oh, w) = (c // width,
    c % width); columns with (c % width) >= OW or c >= OH*width are garbage and
    must be masked / sliced off by the caller.
    """
    cout = w.shape[0]
    acc = jnp.zeros((cout, m_pad), jnp.float32)
    for kh in range(k_h):
        for kw in range(k_w):
            t = kh * k_w + kw
            off = kh * width + kw              # static lane offset per tap
            acc = acc + jnp.dot(
                w[:, t * cin:(t + 1) * cin],   # [Cout, Cin]
                x[:, off:off + m_pad],         # [Cin, m_pad]
                preferred_element_type=jnp.float32)
    return acc


def conv_stats_kernel(x_ref, w_ref, mask_ref, stats_ref, *,
                      cin, width, k_h, k_w, m_pad):
    """Pass 1: per-image conv (kept in VMEM only) + masked BN partial sums.

    x_ref:     [1, Cin, L]      flat padded image
    w_ref:     [Cout, K]        folded weight
    mask_ref:  [1, m_pad]       1.0 on valid (oh, ow) columns, else 0.0
    stats_ref: [1, Cout, 2]     per-image [sum, sum_of_squares] per channel
    """
    x = x_ref[0]
    w = w_ref[...]
    acc = _conv_accumulate(x, w, cin=cin, width=width, k_h=k_h, k_w=k_w,
                           m_pad=m_pad)
    masked = acc * mask_ref[...]
    stats_ref[0, :, 0:1] = jnp.sum(masked, axis=1, keepdims=True)
    stats_ref[0, :, 1:2] = jnp.sum(masked * acc, axis=1, keepdims=True)


def conv_bn_relu_kernel(x_ref, w_ref, ss_ref, o_ref, *,
                        cin, width, k_h, k_w, m_pad):
    """Pass 2: recompute conv, apply folded scale/shift BN + ReLU.

    x_ref:  [1, Cin, L]
    w_ref:  [Cout, K]
    ss_ref: [Cout, 2]     column 0 = scale, column 1 = shift
    o_ref:  [1, Cout, m_pad]
    """
    x = x_ref[0]
    w = w_ref[...]
    acc = _conv_accumulate(x, w, cin=cin, width=width, k_h=k_h, k_w=k_w,
                           m_pad=m_pad)
    scale = ss_ref[:, 0:1]                     # [Cout, 1] -> broadcast on lanes
    shift = ss_ref[:, 1:2]
    o_ref[0] = jnp.maximum(acc * scale + shift, 0.0)


def conv_block_forward(x_nchw, weight, bias, gamma, beta):
    """x_nchw: [N, Cin, H, W]; weight: [Cout, Cin, KH, KW] (PyTorch layouts)."""
    del bias  # cancels exactly under train-mode BatchNorm (batch-mean subtract)

    N, Cin, H, W = x_nchw.shape
    Cout, _, KH, KW = weight.shape
    OH, OW = H - KH + 1, W - KW + 1
    K = KH * KW * Cin
    M_loc = OH * W                               # per-image flat conv domain
    M_pad = _round_up(M_loc, 128)                # lane-dense output width
    L = _round_up((KH - 1) * W + (KW - 1) + M_pad, 128)

    # ---- layout plumbing only (no FLOPs, no duplication) --------------------
    xfl = x_nchw.reshape(N, Cin, H * W).astype(jnp.float32)
    xfl = jnp.pad(xfl, ((0, 0), (0, 0), (0, L - H * W)))          # [N,Cin,L]

    # weight folded to [Cout, K], taps major, cin minor (matches kernel slices)
    w_t = jnp.transpose(weight.astype(jnp.float32), (0, 2, 3, 1)).reshape(Cout, K)

    col = jnp.arange(M_pad)
    mask = ((col < M_loc) & (col % W < OW)).astype(jnp.float32).reshape(1, M_pad)

    static = dict(cin=Cin, width=W, k_h=KH, k_w=KW, m_pad=M_pad)

    # ---- Pass 1: per-image BN partial sums (conv never touches HBM) ---------
    part_stats = pl.pallas_call(
        functools.partial(conv_stats_kernel, **static),
        out_shape=jax.ShapeDtypeStruct((N, Cout, 2), jnp.float32),
        grid=(N,),
        in_specs=[pl.BlockSpec((1, Cin, L), lambda n: (n, 0, 0)),
                  pl.BlockSpec((Cout, K), lambda n: (0, 0)),
                  pl.BlockSpec((1, M_pad), lambda n: (0, 0))],
        out_specs=pl.BlockSpec((1, Cout, 2), lambda n: (n, 0, 0)),
        compiler_params=pltpu.CompilerParams(dimension_semantics=("parallel",)),
    )(xfl, w_t, mask)

    # ---- Tiny cross-image reduction + folded scale/shift (XLA) --------------
    count = float(N * OH * OW)
    stats = jnp.sum(part_stats, axis=0)                            # [Cout, 2]
    mean = stats[:, 0] / count
    var = stats[:, 1] / count - mean * mean      # biased variance (PyTorch BN)
    inv_std = jax.lax.rsqrt(var + EPS)
    scale = gamma.astype(jnp.float32) * inv_std
    shift = beta.astype(jnp.float32) - mean * scale
    ss = jnp.stack([scale, shift], axis=1)                         # [Cout, 2]

    # ---- Pass 2: recompute conv + FMA(scale, shift) + ReLU -------------------
    out_flat = pl.pallas_call(
        functools.partial(conv_bn_relu_kernel, **static),
        out_shape=jax.ShapeDtypeStruct((N, Cout, M_pad), jnp.float32),
        grid=(N,),
        in_specs=[pl.BlockSpec((1, Cin, L), lambda n: (n, 0, 0)),
                  pl.BlockSpec((Cout, K), lambda n: (0, 0)),
                  pl.BlockSpec((Cout, 2), lambda n: (0, 0))],
        out_specs=pl.BlockSpec((1, Cout, M_pad), lambda n: (n, 0, 0)),
        compiler_params=pltpu.CompilerParams(dimension_semantics=("parallel",)),
    )(xfl, w_t, ss)

    # Already channel-major: slice off lane padding + invalid right-edge cols.
    out = out_flat[:, :, :M_loc].reshape(N, Cout, OH, W)[:, :, :, :OW]
    return out                                                     # NCHW


def reference_forward(x_nchw, weight, bias, gamma, beta):
    """Plain-JAX reference (includes the bias, two-pass variance)."""
    out = jax.lax.conv_general_dilated(
        x_nchw.astype(jnp.float32), weight.astype(jnp.float32),
        window_strides=(1, 1), padding="VALID",
        dimension_numbers=("NCHW", "OIHW", "NCHW"),
    ) + bias.reshape(1, -1, 1, 1)
    mean = jnp.mean(out, axis=(0, 2, 3), keepdims=True)
    var = jnp.mean((out - mean) ** 2, axis=(0, 2, 3), keepdims=True)
    y = (out - mean) / jnp.sqrt(var + EPS)
    y = y * gamma.reshape(1, -1, 1, 1) + beta.reshape(1, -1, 1, 1)
    return jnp.maximum(y, 0.0)


if __name__ == "__main__":
    # Conv_block(in_channels=4, out_channels=8), small deterministic problem.
    N, Cin, H, W = 2, 4, 16, 16
    Cout, KH, KW = 8, 3, 3

    key = jax.random.PRNGKey(0)
    kx, kw, kb = jax.random.split(key, 3)

    x = jax.random.normal(kx, (N, Cin, H, W), jnp.float32)
    fan_in = Cin * KH * KW
    weight = jax.random.normal(kw, (Cout, Cin, KH, KW), jnp.float32) / jnp.sqrt(fan_in)
    bias = 0.01 * jax.random.normal(kb, (Cout,), jnp.float32)
    gamma = jnp.ones((Cout,), jnp.float32)   # BatchNorm2d init
    beta = jnp.zeros((Cout,), jnp.float32)   # BatchNorm2d init

    out = jax.jit(conv_block_forward)(x, weight, bias, gamma, beta)
    jax.block_until_ready(out)

    ref = reference_forward(x, weight, bias, gamma, beta)
    assert out.shape == (N, Cout, H - KH + 1, W - KW + 1)
    assert jnp.allclose(out, ref, atol=1e-4, rtol=1e-4), "mismatch vs reference"

    print("KERNEL_OK")
</pallas_src>

<mosaic_0001>
module attributes {stable_mosaic.version = 11 : i64} {
  func.func @conv_stats_kernel(%arg0: i32, %arg1: memref<1x4x384xf32, #tpu.memory_space<vmem>>, %arg2: memref<8x36xf32, #tpu.memory_space<vmem>>, %arg3: memref<1x256xf32, #tpu.memory_space<vmem>>, %arg4: memref<1x8x2xf32, #tpu.memory_space<vmem>>) attributes {dimension_semantics = [#tpu.dimension_semantics<parallel>], iteration_bounds = array<i64: 2>, scalar_prefetch = 0 : i64, scratch_operands = 0 : i64, tpu.core_type = #tpu.core_type<tc>, window_params = [{transform_indices = @transform_0, window_bounds = array<i64: 1, 4, 384>}, {pipeline_mode = #tpu.pipeline_mode<synchronous>, transform_indices = @transform_1, window_bounds = array<i64: 8, 36>}, {pipeline_mode = #tpu.pipeline_mode<synchronous>, transform_indices = @transform_2, window_bounds = array<i64: 1, 256>}, {transform_indices = @transform_3, window_bounds = array<i64: 1, 8, 2>}]} {
    %c0 = arith.constant 0 : index
    %c0_0 = arith.constant 0 : index
    %c0_1 = arith.constant 0 : index
    %0 = vector.load %arg1[%c0, %c0_0, %c0_1] : memref<1x4x384xf32, #tpu.memory_space<vmem>>, vector<1x4x384xf32>
    %1 = vector.shape_cast %0 : vector<1x4x384xf32> to vector<4x384xf32>
    %c0_2 = arith.constant 0 : index
    %c0_3 = arith.constant 0 : index
    %2 = vector.load %arg2[%c0_2, %c0_3] : memref<8x36xf32, #tpu.memory_space<vmem>>, vector<8x36xf32>
    %cst = arith.constant 0.000000e+00 : f32
    %3 = vector.broadcast %cst : f32 to vector<8x256xf32>
    %4 = vector.extract_strided_slice %2 {offsets = [0, 0], sizes = [8, 4], strides = [1, 1]} : vector<8x36xf32> to vector<8x4xf32>
    %5 = vector.extract_strided_slice %1 {offsets = [0, 0], sizes = [4, 256], strides = [1, 1]} : vector<4x384xf32> to vector<4x256xf32>
    %cst_4 = arith.constant dense<0.000000e+00> : vector<8x256xf32>
    %6 = tpu.matmul %4, %5, %cst_4 {dimension_numbers = #tpu.dot_dimension_numbers<[1], [0], [0], [1], [0, 0, 1, 1], [], []>} : vector<8x4xf32>, vector<4x256xf32>, vector<8x256xf32> -> vector<8x256xf32>
    %7 = arith.addf %3, %6 : vector<8x256xf32>
    %8 = vector.extract_strided_slice %2 {offsets = [0, 4], sizes = [8, 4], strides = [1, 1]} : vector<8x36xf32> to vector<8x4xf32>
    %9 = vector.extract_strided_slice %1 {offsets = [0, 1], sizes = [4, 256], strides = [1, 1]} : vector<4x384xf32> to vector<4x256xf32>
    %cst_5 = arith.constant dense<0.000000e+00> : vector<8x256xf32>
    %10 = tpu.matmul %8, %9, %cst_5 {dimension_numbers = #tpu.dot_dimension_numbers<[1], [0], [0], [1], [0, 0, 1, 1], [], []>} : vector<8x4xf32>, vector<4x256xf32>, vector<8x256xf32> -> vector<8x256xf32>
    %11 = arith.addf %7, %10 : vector<8x256xf32>
    %12 = vector.extract_strided_slice %2 {offsets = [0, 8], sizes = [8, 4], strides = [1, 1]} : vector<8x36xf32> to vector<8x4xf32>
    %13 = vector.extract_strided_slice %1 {offsets = [0, 2], sizes = [4, 256], strides = [1, 1]} : vector<4x384xf32> to vector<4x256xf32>
    %cst_6 = arith.constant dense<0.000000e+00> : vector<8x256xf32>
    %14 = tpu.matmul %12, %13, %cst_6 {dimension_numbers = #tpu.dot_dimension_numbers<[1], [0], [0], [1], [0, 0, 1, 1], [], []>} : vector<8x4xf32>, vector<4x256xf32>, vector<8x256xf32> -> vector<8x256xf32>
    %15 = arith.addf %11, %14 : vector<8x256xf32>
    %16 = vector.extract_strided_slice %2 {offsets = [0, 12], sizes = [8, 4], strides = [1, 1]} : vector<8x36xf32> to vector<8x4xf32>
    %17 = vector.extract_strided_slice %1 {offsets = [0, 16], sizes = [4, 256], strides = [1, 1]} : vector<4x384xf32> to vector<4x256xf32>
    %cst_7 = arith.constant dense<0.000000e+00> : vector<8x256xf32>
    %18 = tpu.matmul %16, %17, %cst_7 {dimension_numbers = #tpu.dot_dimension_numbers<[1], [0], [0], [1], [0, 0, 1, 1], [], []>} : vector<8x4xf32>, vector<4x256xf32>, vector<8x256xf32> -> vector<8x256xf32>
    %19 = arith.addf %15, %18 : vector<8x256xf32>
    %20 = vector.extract_strided_slice %2 {offsets = [0, 16], sizes = [8, 4], strides = [1, 1]} : vector<8x36xf32> to vector<8x4xf32>
    %21 = vector.extract_strided_slice %1 {offsets = [0, 17], sizes = [4, 256], strides = [1, 1]} : vector<4x384xf32> to vector<4x256xf32>
    %cst_8 = arith.constant dense<0.000000e+00> : vector<8x256xf32>
    %22 = tpu.matmul %20, %21, %cst_8 {dimension_numbers = #tpu.dot_dimension_numbers<[1], [0], [0], [1], [0, 0, 1, 1], [], []>} : vector<8x4xf32>, vector<4x256xf32>, vector<8x256xf32> -> vector<8x256xf32>
    %23 = arith.addf %19, %22 : vector<8x256xf32>
    %24 = vector.extract_strided_slice %2 {offsets = [0, 20], sizes = [8, 4], strides = [1, 1]} : vector<8x36xf32> to vector<8x4xf32>
    %25 = vector.extract_strided_slice %1 {offsets = [0, 18], sizes = [4, 256], strides = [1, 1]} : vector<4x384xf32> to vector<4x256xf32>
    %cst_9 = arith.constant dense<0.000000e+00> : vector<8x256xf32>
    %26 = tpu.matmul %24, %25, %cst_9 {dimension_numbers = #tpu.dot_dimension_numbers<[1], [0], [0], [1], [0, 0, 1, 1], [], []>} : vector<8x4xf32>, vector<4x256xf32>, vector<8x256xf32> -> vector<8x256xf32>
    %27 = arith.addf %23, %26 : vector<8x256xf32>
    %28 = vector.extract_strided_slice %2 {offsets = [0, 24], sizes = [8, 4], strides = [1, 1]} : vector<8x36xf32> to vector<8x4xf32>
    %29 = vector.extract_strided_slice %1 {offsets = [0, 32], sizes = [4, 256], strides = [1, 1]} : vector<4x384xf32> to vector<4x256xf32>
    %cst_10 = arith.constant dense<0.000000e+00> : vector<8x256xf32>
    %30 = tpu.matmul %28, %29, %cst_10 {dimension_numbers = #tpu.dot_dimension_numbers<[1], [0], [0], [1], [0, 0, 1, 1], [], []>} : vector<8x4xf32>, vector<4x256xf32>, vector<8x256xf32> -> vector<8x256xf32>
    %31 = arith.addf %27, %30 : vector<8x256xf32>
    %32 = vector.extract_strided_slice %2 {offsets = [0, 28], sizes = [8, 4], strides = [1, 1]} : vector<8x36xf32> to vector<8x4xf32>
    %33 = vector.extract_strided_slice %1 {offsets = [0, 33], sizes = [4, 256], strides = [1, 1]} : vector<4x384xf32> to vector<4x256xf32>
    %cst_11 = arith.constant dense<0.000000e+00> : vector<8x256xf32>
    %34 = tpu.matmul %32, %33, %cst_11 {dimension_numbers = #tpu.dot_dimension_numbers<[1], [0], [0], [1], [0, 0, 1, 1], [], []>} : vector<8x4xf32>, vector<4x256xf32>, vector<8x256xf32> -> vector<8x256xf32>
    %35 = arith.addf %31, %34 : vector<8x256xf32>
    %36 = vector.extract_strided_slice %2 {offsets = [0, 32], sizes = [8, 4], strides = [1, 1]} : vector<8x36xf32> to vector<8x4xf32>
    %37 = vector.extract_strided_slice %1 {offsets = [0, 34], sizes = [4, 256], strides = [1, 1]} : vector<4x384xf32> to vector<4x256xf32>
    %cst_12 = arith.constant dense<0.000000e+00> : vector<8x256xf32>
    %38 = tpu.matmul %36, %37, %cst_12 {dimension_numbers = #tpu.dot_dimension_numbers<[1], [0], [0], [1], [0, 0, 1, 1], [], []>} : vector<8x4xf32>, vector<4x256xf32>, vector<8x256xf32> -> vector<8x256xf32>
    %39 = arith.addf %35, %38 : vector<8x256xf32>
    %c0_13 = arith.constant 0 : index
    %c0_14 = arith.constant 0 : index
    %40 = vector.load %arg3[%c0_13, %c0_14] : memref<1x256xf32, #tpu.memory_space<vmem>>, vector<1x256xf32>
    %41 = vector.broadcast %40 : vector<1x256xf32> to vector<8x256xf32>
    %42 = arith.mulf %39, %41 : vector<8x256xf32>
    %cst_15 = arith.constant dense<0.000000e+00> : vector<8xf32>
    %43 = vector.multi_reduction <add>, %42, %cst_15 [1] : vector<8x256xf32> to vector<8xf32>
    %44 = vector.shape_cast %43 : vector<8xf32> to vector<8x1xf32>
    %c0_16 = arith.constant 0 : index
    %c0_17 = arith.constant 0 : index
    %c0_18 = arith.constant 0 : index
    %45 = vector.load %arg4[%c0_16, %c0_17, %c0_18] : memref<1x8x2xf32, #tpu.memory_space<vmem>>, vector<1x8x1xf32>
    %46 = vector.shape_cast %45 : vector<1x8x1xf32> to vector<8x1xf32>
    %47 = vector.shape_cast %44 : vector<8x1xf32> to vector<1x8x1xf32>
    tpu.vector_store %arg4[%c0_16, %c0_17, %c0_18], %47 {strides = array<i32>} : memref<1x8x2xf32, #tpu.memory_space<vmem>>, vector<1x8x1xf32>,
    %48 = arith.mulf %42, %39 : vector<8x256xf32>
    %cst_19 = arith.constant dense<0.000000e+00> : vector<8xf32>
    %49 = vector.multi_reduction <add>, %48, %cst_19 [1] : vector<8x256xf32> to vector<8xf32>
    %50 = vector.shape_cast %49 : vector<8xf32> to vector<8x1xf32>
    %c0_20 = arith.constant 0 : index
    %c0_21 = arith.constant 0 : index
    %c1 = arith.constant 1 : index
    %51 = vector.load %arg4[%c0_20, %c0_21, %c1] : memref<1x8x2xf32, #tpu.memory_space<vmem>>, vector<1x8x1xf32>
    %52 = vector.shape_cast %51 : vector<1x8x1xf32> to vector<8x1xf32>
    %53 = vector.shape_cast %50 : vector<8x1xf32> to vector<1x8x1xf32>
    tpu.vector_store %arg4[%c0_20, %c0_21, %c1], %53 {strides = array<i32>} : memref<1x8x2xf32, #tpu.memory_space<vmem>>, vector<1x8x1xf32>,
    return
  }
  func.func @transform_0(%arg0: i32) -> (i32, i32, i32) {
    %c0_i32 = arith.constant 0 : i32
    %c0_i32_0 = arith.constant 0 : i32
    %c0_i32_1 = arith.constant 0 : i32
    return %arg0, %c0_i32, %c0_i32_0 : i32, i32, i32
  }
  func.func @transform_1(%arg0: i32) -> (i32, i32) {
    %c0_i32 = arith.constant 0 : i32
    %c0_i32_0 = arith.constant 0 : i32
    %c0_i32_1 = arith.constant 0 : i32
    return %c0_i32, %c0_i32_0 : i32, i32
  }
  func.func @transform_2(%arg0: i32) -> (i32, i32) {
    %c0_i32 = arith.constant 0 : i32
    %c0_i32_0 = arith.constant 0 : i32
    %c0_i32_1 = arith.constant 0 : i32
    return %c0_i32, %c0_i32_0 : i32, i32
  }
  func.func @transform_3(%arg0: i32) -> (i32, i32, i32) {
    %c0_i32 = arith.constant 0 : i32
    %c0_i32_0 = arith.constant 0 : i32
    %c0_i32_1 = arith.constant 0 : i32
    return %arg0, %c0_i32, %c0_i32_0 : i32, i32, i32
  }
}

module attributes {stable_mosaic.version = 11 : i64} {
  func.func @conv_bn_relu_kernel(%arg0: i32, %arg1: memref<1x4x384xf32, #tpu.memory_space<vmem>>, %arg2: memref<8x36xf32, #tpu.memory_space<vmem>>, %arg3: memref<8x2xf32, #tpu.memory_space<vmem>>, %arg4: memref<1x8x256xf32, #tpu.memory_space<vmem>>) attributes {dimension_semantics = [#tpu.dimension_semantics<parallel>], iteration_bounds = array<i64: 2>, scalar_prefetch = 0 : i64, scratch_operands = 0 : i64, tpu.core_type = #tpu.core_type<tc>, window_params = [{transform_indices = @transform_0, window_bounds = array<i64: 1, 4, 384>}, {pipeline_mode = #tpu.pipeline_mode<synchronous>, transform_indices = @transform_1, window_bounds = array<i64: 8, 36>}, {pipeline_mode = #tpu.pipeline_mode<synchronous>, transform_indices = @transform_2, window_bounds = array<i64: 8, 2>}, {transform_indices = @transform_3, window_bounds = array<i64: 1, 8, 256>}]} {
    %c0 = arith.constant 0 : index
    %c0_0 = arith.constant 0 : index
    %c0_1 = arith.constant 0 : index
    %0 = vector.load %arg1[%c0, %c0_0, %c0_1] : memref<1x4x384xf32, #tpu.memory_space<vmem>>, vector<1x4x384xf32>
    %1 = vector.shape_cast %0 : vector<1x4x384xf32> to vector<4x384xf32>
    %c0_2 = arith.constant 0 : index
    %c0_3 = arith.constant 0 : index
    %2 = vector.load %arg2[%c0_2, %c0_3] : memref<8x36xf32, #tpu.memory_space<vmem>>, vector<8x36xf32>
    %cst = arith.constant 0.000000e+00 : f32
    %3 = vector.broadcast %cst : f32 to vector<8x256xf32>
    %4 = vector.extract_strided_slice %2 {offsets = [0, 0], sizes = [8, 4], strides = [1, 1]} : vector<8x36xf32> to vector<8x4xf32>
    %5 = vector.extract_strided_slice %1 {offsets = [0, 0], sizes = [4, 256], strides = [1, 1]} : vector<4x384xf32> to vector<4x256xf32>
    %cst_4 = arith.constant dense<0.000000e+00> : vector<8x256xf32>
    %6 = tpu.matmul %4, %5, %cst_4 {dimension_numbers = #tpu.dot_dimension_numbers<[1], [0], [0], [1], [0, 0, 1, 1], [], []>} : vector<8x4xf32>, vector<4x256xf32>, vector<8x256xf32> -> vector<8x256xf32>
    %7 = arith.addf %3, %6 : vector<8x256xf32>
    %8 = vector.extract_strided_slice %2 {offsets = [0, 4], sizes = [8, 4], strides = [1, 1]} : vector<8x36xf32> to vector<8x4xf32>
    %9 = vector.extract_strided_slice %1 {offsets = [0, 1], sizes = [4, 256], strides = [1, 1]} : vector<4x384xf32> to vector<4x256xf32>
    %cst_5 = arith.constant dense<0.000000e+00> : vector<8x256xf32>
    %10 = tpu.matmul %8, %9, %cst_5 {dimension_numbers = #tpu.dot_dimension_numbers<[1], [0], [0], [1], [0, 0, 1, 1], [], []>} : vector<8x4xf32>, vector<4x256xf32>, vector<8x256xf32> -> vector<8x256xf32>
    %11 = arith.addf %7, %10 : vector<8x256xf32>
    %12 = vector.extract_strided_slice %2 {offsets = [0, 8], sizes = [8, 4], strides = [1, 1]} : vector<8x36xf32> to vector<8x4xf32>
    %13 = vector.extract_strided_slice %1 {offsets = [0, 2], sizes = [4, 256], strides = [1, 1]} : vector<4x384xf32> to vector<4x256xf32>
    %cst_6 = arith.constant dense<0.000000e+00> : vector<8x256xf32>
    %14 = tpu.matmul %12, %13, %cst_6 {dimension_numbers = #tpu.dot_dimension_numbers<[1], [0], [0], [1], [0, 0, 1, 1], [], []>} : vector<8x4xf32>, vector<4x256xf32>, vector<8x256xf32> -> vector<8x256xf32>
    %15 = arith.addf %11, %14 : vector<8x256xf32>
    %16 = vector.extract_strided_slice %2 {offsets = [0, 12], sizes = [8, 4], strides = [1, 1]} : vector<8x36xf32> to vector<8x4xf32>
    %17 = vector.extract_strided_slice %1 {offsets = [0, 16], sizes = [4, 256], strides = [1, 1]} : vector<4x384xf32> to vector<4x256xf32>
    %cst_7 = arith.constant dense<0.000000e+00> : vector<8x256xf32>
    %18 = tpu.matmul %16, %17, %cst_7 {dimension_numbers = #tpu.dot_dimension_numbers<[1], [0], [0], [1], [0, 0, 1, 1], [], []>} : vector<8x4xf32>, vector<4x256xf32>, vector<8x256xf32> -> vector<8x256xf32>
    %19 = arith.addf %15, %18 : vector<8x256xf32>
    %20 = vector.extract_strided_slice %2 {offsets = [0, 16], sizes = [8, 4], strides = [1, 1]} : vector<8x36xf32> to vector<8x4xf32>
    %21 = vector.extract_strided_slice %1 {offsets = [0, 17], sizes = [4, 256], strides = [1, 1]} : vector<4x384xf32> to vector<4x256xf32>
    %cst_8 = arith.constant dense<0.000000e+00> : vector<8x256xf32>
    %22 = tpu.matmul %20, %21, %cst_8 {dimension_numbers = #tpu.dot_dimension_numbers<[1], [0], [0], [1], [0, 0, 1, 1], [], []>} : vector<8x4xf32>, vector<4x256xf32>, vector<8x256xf32> -> vector<8x256xf32>
    %23 = arith.addf %19, %22 : vector<8x256xf32>
    %24 = vector.extract_strided_slice %2 {offsets = [0, 20], sizes = [8, 4], strides = [1, 1]} : vector<8x36xf32> to vector<8x4xf32>
    %25 = vector.extract_strided_slice %1 {offsets = [0, 18], sizes = [4, 256], strides = [1, 1]} : vector<4x384xf32> to vector<4x256xf32>
    %cst_9 = arith.constant dense<0.000000e+00> : vector<8x256xf32>
    %26 = tpu.matmul %24, %25, %cst_9 {dimension_numbers = #tpu.dot_dimension_numbers<[1], [0], [0], [1], [0, 0, 1, 1], [], []>} : vector<8x4xf32>, vector<4x256xf32>, vector<8x256xf32> -> vector<8x256xf32>
    %27 = arith.addf %23, %26 : vector<8x256xf32>
    %28 = vector.extract_strided_slice %2 {offsets = [0, 24], sizes = [8, 4], strides = [1, 1]} : vector<8x36xf32> to vector<8x4xf32>
    %29 = vector.extract_strided_slice %1 {offsets = [0, 32], sizes = [4, 256], strides = [1, 1]} : vector<4x384xf32> to vector<4x256xf32>
    %cst_10 = arith.constant dense<0.000000e+00> : vector<8x256xf32>
    %30 = tpu.matmul %28, %29, %cst_10 {dimension_numbers = #tpu.dot_dimension_numbers<[1], [0], [0], [1], [0, 0, 1, 1], [], []>} : vector<8x4xf32>, vector<4x256xf32>, vector<8x256xf32> -> vector<8x256xf32>
    %31 = arith.addf %27, %30 : vector<8x256xf32>
    %32 = vector.extract_strided_slice %2 {offsets = [0, 28], sizes = [8, 4], strides = [1, 1]} : vector<8x36xf32> to vector<8x4xf32>
    %33 = vector.extract_strided_slice %1 {offsets = [0, 33], sizes = [4, 256], strides = [1, 1]} : vector<4x384xf32> to vector<4x256xf32>
    %cst_11 = arith.constant dense<0.000000e+00> : vector<8x256xf32>
    %34 = tpu.matmul %32, %33, %cst_11 {dimension_numbers = #tpu.dot_dimension_numbers<[1], [0], [0], [1], [0, 0, 1, 1], [], []>} : vector<8x4xf32>, vector<4x256xf32>, vector<8x256xf32> -> vector<8x256xf32>
    %35 = arith.addf %31, %34 : vector<8x256xf32>
    %36 = vector.extract_strided_slice %2 {offsets = [0, 32], sizes = [8, 4], strides = [1, 1]} : vector<8x36xf32> to vector<8x4xf32>
    %37 = vector.extract_strided_slice %1 {offsets = [0, 34], sizes = [4, 256], strides = [1, 1]} : vector<4x384xf32> to vector<4x256xf32>
    %cst_12 = arith.constant dense<0.000000e+00> : vector<8x256xf32>
    %38 = tpu.matmul %36, %37, %cst_12 {dimension_numbers = #tpu.dot_dimension_numbers<[1], [0], [0], [1], [0, 0, 1, 1], [], []>} : vector<8x4xf32>, vector<4x256xf32>, vector<8x256xf32> -> vector<8x256xf32>
    %39 = arith.addf %35, %38 : vector<8x256xf32>
    %c0_13 = arith.constant 0 : index
    %c0_14 = arith.constant 0 : index
    %40 = vector.load %arg3[%c0_13, %c0_14] : memref<8x2xf32, #tpu.memory_space<vmem>>, vector<8x1xf32>
    %c0_15 = arith.constant 0 : index
    %c1 = arith.constant 1 : index
    %41 = vector.load %arg3[%c0_15, %c1] : memref<8x2xf32, #tpu.memory_space<vmem>>, vector<8x1xf32>
    %42 = vector.broadcast %40 : vector<8x1xf32> to vector<8x256xf32>
    %43 = arith.mulf %39, %42 : vector<8x256xf32>
    %44 = vector.broadcast %41 : vector<8x1xf32> to vector<8x256xf32>
    %45 = arith.addf %43, %44 : vector<8x256xf32>
    %cst_16 = arith.constant 0.000000e+00 : f32
    %46 = vector.broadcast %cst_16 : f32 to vector<8x256xf32>
    %47 = arith.maximumf %45, %46 : vector<8x256xf32>
    %c0_17 = arith.constant 0 : index
    %c0_18 = arith.constant 0 : index
    %c0_19 = arith.constant 0 : index
    %48 = vector.load %arg4[%c0_17, %c0_18, %c0_19] : memref<1x8x256xf32, #tpu.memory_space<vmem>>, vector<1x8x256xf32>
    %49 = vector.shape_cast %48 : vector<1x8x256xf32> to vector<8x256xf32>
    %50 = vector.shape_cast %47 : vector<8x256xf32> to vector<1x8x256xf32>
    tpu.vector_store %arg4[%c0_17, %c0_18, %c0_19], %50 {strides = array<i32>} : memref<1x8x256xf32, #tpu.memory_space<vmem>>, vector<1x8x256xf32>,
    return
  }
  func.func @transform_0(%arg0: i32) -> (i32, i32, i32) {
    %c0_i32 = arith.constant 0 : i32
    %c0_i32_0 = arith.constant 0 : i32
    %c0_i32_1 = arith.constant 0 : i32
    return %arg0, %c0_i32, %c0_i32_0 : i32, i32, i32
  }
  func.func @transform_1(%arg0: i32) -> (i32, i32) {
    %c0_i32 = arith.constant 0 : i32
    %c0_i32_0 = arith.constant 0 : i32
    %c0_i32_1 = arith.constant 0 : i32
    return %c0_i32, %c0_i32_0 : i32, i32
  }
  func.func @transform_2(%arg0: i32) -> (i32, i32) {
    %c0_i32 = arith.constant 0 : i32
    %c0_i32_0 = arith.constant 0 : i32
    %c0_i32_1 = arith.constant 0 : i32
    return %c0_i32, %c0_i32_0 : i32, i32
  }
  func.func @transform_3(%arg0: i32) -> (i32, i32, i32) {
    %c0_i32 = arith.constant 0 : i32
    %c0_i32_0 = arith.constant 0 : i32
    %c0_i32_1 = arith.constant 0 : i32
    return %arg0, %c0_i32, %c0_i32_0 : i32, i32, i32
  }
}

</mosaic_0001>

<llo_original>
// kernel: conv_block_forward.3
$region0: #{conv_block_forward.3}
  #allocation0 [shape = 'u32[]', space=smem, size = 0x4, offset = 0x4, fixed_abs, tag = 'smem constant byte address 0x4 - core index']
  #allocation1 [shape = 'u32[144,128]{1,0:T(1,128)}', space=vmem, size = 0x12000, scoped, tag = 'internal scratch']
  %s0 = inlined_call_operand.vmem [shape: f32[2,4,384], index: 0, kind: input, shape index: {}]
  %s1 = inlined_call_operand.vmem [shape: f32[8,36], index: 1, kind: input, shape index: {}]
  %s2 = inlined_call_operand.vmem [shape: f32[8,2], index: 2, kind: input, shape index: {}]
  %s3 = inlined_call_operand.vmem [shape: f32[2,8,256], index: 3, kind: output, shape index: {}]
  %s4 = sld [smem:[#allocation0]]
  $region45: #{conv_block_forward.3} parent=0
    _
  %s6 = ssub.s32 1, %s4
  %s7 = scalar_select 0, %s6, %s4
  loop: start=0, step=1, limit=4
  $region2: #{conv_block_forward.3} parent=0 // loop_pre_header
    _
  $region3: #{conv_block_forward.3} parent=0 // loop_header
    %s9 = sphi 0, %s13
    %p10 = scmp.ge.s32.totalorder %s9, 4
    %s19 = sphi 0, %s21
    %s22 = sphi 0, %s19
    %s23 = sphi 0, %s22
    %s39 = sphi 0, %s23
    %s43 = sphi 0, %s43
    %s45 = sphi 0, %s43
    %s46 = sphi 0, %s45
    %s60 = sphi 0, %s46
    %s64 = sphi 0, %s64
    %s66 = sphi 0, %s64
    %s67 = sphi 0, %s66
    %s81 = sphi 0, %s67
    %s87 = sphi 0, %s89
    %s90 = sphi 0, %s87
    %s91 = sphi 0, %s90
    %s107 = sphi 0, %s91
  $region4: #{conv_block_forward.3} parent=0 // loop_header_branch
    %12 = sbr.rel (%p10) target = $region8
  $region5: #{conv_block_forward.3} parent=0 // loop_body
    %s14 = ssub.s32 %s9, 1
    %s15 = ssub.s32 %s9, 2
    %s16 = sadd.s32 %s9, 1
    %s17 = ssub.s32 %s9, %s16
    %p18 = scmp.eq.s32.totalorder %s17, 0
    %s20 = sadd.s32 %s19, 1
    %s21 = scalar_select %p18, %s19, %s20
    %p24 = pneg %p18
    %p25 = scmp.eq.s32.totalorder %s9, 1
    %p26 = por %p24, %p25
    %p27 = scmp.ne.s32.totalorder %s19, %s22
    %p28 = scmp.eq.s32.totalorder %s9, 0
    %p29 = por %p27, %p28
    %p30 = scmp.ne.s32.totalorder %s19, %s22
    %p31 = scmp.eq.s32.totalorder %s14, 1
    %p32 = por %p30, %p31
    %p33 = scmp.ne.s32.totalorder %s22, %s23
    %p34 = scmp.eq.s32.totalorder %s14, 0
    %p35 = por %p33, %p34
    %p36 = scmp.ne.s32.totalorder %s22, %s23
    %p37 = scmp.eq.s32.totalorder %s15, 1
    %p38 = por %p36, %p37
    %p40 = scmp.ne.s32.totalorder %s23, %s39
    %p41 = scmp.eq.s32.totalorder %s15, 0
    %p42 = por %p40, %p41
    %s44 = sadd.s32 %s43, 1
    %p47 = scmp.eq.s32.totalorder %s9, 1
    %p48 = scmp.ne.s32.totalorder %s43, %s45
    %p49 = scmp.eq.s32.totalorder %s9, 0
    %p50 = por %p48, %p49
    %p51 = scmp.ne.s32.totalorder %s43, %s45
    %p52 = scmp.eq.s32.totalorder %s14, 1
    %p53 = por %p51, %p52
    %p54 = scmp.ne.s32.totalorder %s45, %s46
    %p55 = scmp.eq.s32.totalorder %s14, 0
    %p56 = por %p54, %p55
    %p57 = scmp.ne.s32.totalorder %s45, %s46
    %p58 = scmp.eq.s32.totalorder %s15, 1
    %p59 = por %p57, %p58
    %p61 = scmp.ne.s32.totalorder %s46, %s60
    %p62 = scmp.eq.s32.totalorder %s15, 0
    %p63 = por %p61, %p62
    %s65 = sadd.s32 %s64, 1
    %p68 = scmp.eq.s32.totalorder %s9, 1
    %p69 = scmp.ne.s32.totalorder %s64, %s66
    %p70 = scmp.eq.s32.totalorder %s9, 0
    %p71 = por %p69, %p70
    %p72 = scmp.ne.s32.totalorder %s64, %s66
    %p73 = scmp.eq.s32.totalorder %s14, 1
    %p74 = por %p72, %p73
    %p75 = scmp.ne.s32.totalorder %s66, %s67
    %p76 = scmp.eq.s32.totalorder %s14, 0
    %p77 = por %p75, %p76
    %p78 = scmp.ne.s32.totalorder %s66, %s67
    %p79 = scmp.eq.s32.totalorder %s15, 1
    %p80 = por %p78, %p79
    %p82 = scmp.ne.s32.totalorder %s67, %s81
    %p83 = scmp.eq.s32.totalorder %s15, 0
    %p84 = por %p82, %p83
    %s85 = ssub.s32 %s9, %s16
    %p86 = scmp.eq.s32.totalorder %s85, 0
    %s88 = sadd.s32 %s87, 1
    %s89 = scalar_select %p86, %s87, %s88
    %p92 = pneg %p86
    %p93 = scmp.eq.s32.totalorder %s9, 1
    %p94 = por %p92, %p93
    %p95 = scmp.ne.s32.totalorder %s87, %s90
    %p96 = scmp.eq.s32.totalorder %s9, 0
    %p97 = por %p95, %p96
    %p98 = scmp.ne.s32.totalorder %s87, %s90
    %p99 = scmp.eq.s32.totalorder %s14, 1
    %p100 = por %p98, %p99
    %p101 = scmp.ne.s32.totalorder %s90, %s91
    %p102 = scmp.eq.s32.totalorder %s14, 0
    %p103 = por %p101, %p102
    %p104 = scmp.ne.s32.totalorder %s90, %s91
    %p105 = scmp.eq.s32.totalorder %s15, 1
    %p106 = por %p104, %p105
    %p108 = scmp.ne.s32.totalorder %s91, %s107
    %p109 = scmp.eq.s32.totalorder %s15, 0
    %p110 = por %p108, %p109
    %p111 = scmp.le.s32.totalorder 1, %s9
    %p112 = scmp.lt.s32.totalorder %s9, 3
    %p113 = pnand %p111, %p112
    %p114 = pneg %p113
    // Predicated region
    $region9: #{conv_block_forward.3} parent=5 // pred_check
      _
    $region10: #{conv_block_forward.3} parent=5 // pred_check_branch
      %116 = sbr.rel (%p113) target = $region12
    $region11: #{conv_block_forward.3} parent=5 // pred_region
      %s117 = ssub.s32 %s9, 1
      // Predicated region
      $region13: #{conv_block_forward.3} parent=11 // pred_check
        %p118 = pneg %p56
      $region14: #{conv_block_forward.3} parent=11 // pred_check_branch
        %120 = sbr.rel (%p118) target = $region16
      $region15: #{conv_block_forward.3} parent=11 // pred_region
        _
      $region16: #{conv_block_forward.3} parent=11 // pred_fallthru
        _
      // Predicated region
      $region17: #{conv_block_forward.3} parent=11 // pred_check
        %p121 = pneg %p77
      $region18: #{conv_block_forward.3} parent=11 // pred_check_branch
        %123 = sbr.rel (%p121) target = $region20
      $region19: #{conv_block_forward.3} parent=11 // pred_region
        _
      $region20: #{conv_block_forward.3} parent=11 // pred_fallthru
        _
    $region12: #{conv_block_forward.3} parent=5 // pred_fallthru
      _
    %p124 = scmp.lt.s32.totalorder %s9, 2
    // Predicated region
    $region21: #{conv_block_forward.3} parent=5 // pred_check
      %p125 = pneg %p124
    $region22: #{conv_block_forward.3} parent=5 // pred_check_branch
      %127 = sbr.rel (%p125) target = $region24
    $region23: #{conv_block_forward.3} parent=5 // pred_region
      // Predicated region
      $region25: #{conv_block_forward.3} parent=23 // pred_check
        %p128 = pneg %p29
      $region26: #{conv_block_forward.3} parent=23 // pred_check_branch
        %130 = sbr.rel (%p128) target = $region28
      $region27: #{conv_block_forward.3} parent=23 // pred_region
        %p131 = scmp.lt.s32.totalorder %s9, 1
        %s132 = scalar_select %p131, %s9, 1
        %s133 = smul.addr %s132, 3
        %s134 = smul.addr %s133, 4
        %s135 = scalar_lea.vmem %s0, %s134
      $region28: #{conv_block_forward.3} parent=23 // pred_fallthru
        _
    $region24: #{conv_block_forward.3} parent=5 // pred_fallthru
      _
    %p136 = scmp.le.s32.totalorder 1, %s9
    %p137 = scmp.lt.s32.totalorder %s9, 3
    %p138 = pnand %p136, %p137
    %p139 = pneg %p138
    // Predicated region
    $region29: #{conv_block_forward.3} parent=5 // pred_check
      _
    $region30: #{conv_block_forward.3} parent=5 // pred_check_branch
      %141 = sbr.rel (%p138) target = $region32
    $region31: #{conv_block_forward.3} parent=5 // pred_region
      %s142 = ssub.s32 %s9, 1
      %p143 = scmp.lt.s32.totalorder %s14, 1
      %s144 = scalar_select %p143, %s14, 1
      %s145 = smul.addr %s144, 3
      %s146 = smul.addr %s145, 4
      %s147 = scalar_lea.vmem %s0, %s146
      %p148 = pneg %p35
      %p149 = pneg %p32
      %p150 = pneg %p56
      %p151 = pneg %p53
      %p152 = pneg %p77
      %p153 = pneg %p74
      %p154 = pneg %p103
      %p155 = pneg %p100
      %p156 = scmp.lt.s32.totalorder %s14, 1
      %s157 = scalar_select %p156, %s14, 1
      %s158 = smul.addr %s157, 2
      %s159 = smul.addr %s158, 8
      %s160 = scalar_lea.vmem %s3, %s159
      %p161 = scmp.lt.s32.totalorder %s14, 1
      %s162 = scalar_select %p161, %s14, 1
      %s163 = smul.addr %s162, 3
      %s164 = smul.addr %s163, 4
      %s165 = scalar_lea.vmem %s0, %s164
      %p166 = scmp.lt.s32.totalorder %s14, 1
      %s167 = scalar_select %p166, %s14, 1
      %s168 = smul.addr %s167, 2
      %s169 = smul.addr %s168, 8
      %s170 = scalar_lea.vmem %s3, %s169
      %v171 = vld [vmem:[%s165] sm:$0xff]
      %v172 = vld [vmem:[%s165 + $0x8] sm:$0xf]
      %v173 = vld [vmem:[%s1] sm:$0xff]
      %175 = vrot.lane.b32.xlu0 %v173, 124
      %v176 = vpop.permute.xlu0 %175
      %v179 = vcombine.high %v171, %v171
      %180 = vrot.lane.b32.xlu0 %v171, 127
      %v181 = vpop.permute.xlu0 %180
      %182 = vrot.lane.b32.xlu0 %v179, 127
      %v183 = vpop.permute.xlu0 %182
      %184 = vrot.lane.b32.xlu0 %v172, 127
      %v185 = vpop.permute.xlu0 %184
      %vm186 = vcmask 1039360
      %v187 = vsel %vm186, %v181, %v183
      %v188 = vsel %vm186, %v183, %v185
      %vm189 = vcmask 31744
      %v190 = vsel %vm189, %v176, 0
      %vm192 = vcmask 1043456
      %v193 = vsel %vm192, %v187, 0
      %v195 = vsel %vm192, %v188, 0
      %197 = vmatprep.subr.mxu0 %v195
      %198 = vmatpush1.msra.mxu0 %v193
      %199 = vmatprep.subr.mxu0 0.0
      %200 = vmatpush1.msra.mxu0 0.0
      %201 = vmatprep.subr.mxu0 0.0
      %202 = vmatpush1.msra.mxu0 0.0
      %203 = vmatprep.subr.mxu0 0.0
      %204 = vmatpush1.msra.mxu0 0.0
      %205 = vmatprep.subr.mxu0 0.0
      %206 = vmatpush1.msra.mxu0 0.0
      %207 = vmatprep.subr.mxu0 0.0
      %208 = vmatpush1.msra.mxu0 0.0
      %209 = vmatprep.subr.mxu0 0.0
      %210 = vmatpush1.msra.mxu0 0.0
      %211 = vmatprep.subr.mxu0 0.0
      %212 = vmatpush1.msra.mxu0 0.0
      %213 = vmatprep.subr.mxu0 0.0
      %214 = vmatpush1.msra.mxu0 0.0
      %215 = vmatprep.subr.mxu0 0.0
      %216 = vmatpush1.msra.mxu0 0.0
      %217 = vmatprep.subr.mxu0 0.0
      %218 = vmatpush1.msra.mxu0 0.0
      %219 = vmatprep.subr.mxu0 0.0
      %220 = vmatpush1.msra.mxu0 0.0
      %221 = vmatprep.subr.mxu0 0.0
      %222 = vmatpush1.msra.mxu0 0.0
      %223 = vmatprep.subr.mxu0 0.0
      %224 = vmatpush1.msra.mxu0 0.0
      %225 = vmatprep.subr.mxu0 0.0
      %226 = vmatpush1.msra.mxu0 0.0
      %227 = vmatprep.subr.mxu0 0.0
      %228 = vmatpush1.msra.mxu0 0.0
      %229 = vmatprep.subr.mxu0 0.0
      %230 = vmatpush1.msra.mxu0 0.0
      %231 = vmatprep.subr.mxu0 0.0
      %232 = vmatpush1.msra.mxu0 0.0
      %233 = vmatprep.subr.mxu0 0.0
      %234 = vmatpush1.msra.mxu0 0.0
      %235 = vmatprep.subr.mxu0 0.0
      %236 = vmatpush1.msra.mxu0 0.0
      %237 = vmatprep.subr.mxu0 0.0
      %238 = vmatpush1.msra.mxu0 0.0
      %239 = vmatprep.subr.mxu0 0.0
      %240 = vmatpush1.msra.mxu0 0.0
      %241 = vmatprep.subr.mxu0 0.0
      %242 = vmatpush1.msra.mxu0 0.0
      %243 = vmatprep.subr.mxu0 0.0
      %244 = vmatpush1.msra.mxu0 0.0
      %245 = vmatprep.subr.mxu0 0.0
      %246 = vmatpush1.msra.mxu0 0.0
      %247 = vmatprep.subr.mxu0 0.0
      %248 = vmatpush1.msra.mxu0 0.0
      %249 = vmatprep.subr.mxu0 0.0
      %250 = vmatpush1.msra.mxu0 0.0
      %251 = vmatprep.subr.mxu0 0.0
      %252 = vmatpush1.msra.mxu0 0.0
      %253 = vmatprep.subr.mxu0 0.0
      %254 = vmatpush1.msra.mxu0 0.0
      %255 = vmatprep.subr.mxu0 0.0
      %256 = vmatpush1.msra.mxu0 0.0
      %257 = vmatprep.subr.mxu0 0.0
      %258 = vmatpush1.msra.mxu0 0.0
      %259 = vmatprep.subr.mxu0 0.0
      %260 = vmatpush1.msra.mxu0 0.0
      %261 = vmatprep.mubr.f32.mxu0 0.0
      %262 = vmatmul.mubr.f32.gmra.mrb[0].mxu0 %v190
      %v263 = vpop.f32.mrb[0].mxu0
      %v264 = vadd.f32 0.0, %v263
      %v265 = vpop.f32.mrb[0].mxu0
      %v266 = vadd.f32 0.0, %v265
      %267 = vdwg.mxu0
      %v268 = vsel %vm189, %v173, 0
      %v270 = vsel %vm192, %v171, 0
      %v272 = vsel %vm192, %v179, 0
      %274 = vmatprep.subr.mxu0 %v272
      %275 = vmatpush1.msra.mxu0 %v270
      %276 = vmatprep.subr.mxu0 0.0
      %277 = vmatpush1.msra.mxu0 0.0
      %278 = vmatprep.subr.mxu0 0.0
      %279 = vmatpush1.msra.mxu0 0.0
      %280 = vmatprep.subr.mxu0 0.0
      %281 = vmatpush1.msra.mxu0 0.0
      %282 = vmatprep.subr.mxu0 0.0
      %283 = vmatpush1.msra.mxu0 0.0
      %284 = vmatprep.subr.mxu0 0.0
      %285 = vmatpush1.msra.mxu0 0.0
      %286 = vmatprep.subr.mxu0 0.0
      %287 = vmatpush1.msra.mxu0 0.0
      %288 = vmatprep.subr.mxu0 0.0
      %289 = vmatpush1.msra.mxu0 0.0
      %290 = vmatprep.subr.mxu0 0.0
      %291 = vmatpush1.msra.mxu0 0.0
      %292 = vmatprep.subr.mxu0 0.0
      %293 = vmatpush1.msra.mxu0 0.0
      %294 = vmatprep.subr.mxu0 0.0
      %295 = vmatpush1.msra.mxu0 0.0
      %296 = vmatprep.subr.mxu0 0.0
      %297 = vmatpush1.msra.mxu0 0.0
      %298 = vmatprep.subr.mxu0 0.0
      %299 = vmatpush1.msra.mxu0 0.0
      %300 = vmatprep.subr.mxu0 0.0
      %301 = vmatpush1.msra.mxu0 0.0
      %302 = vmatprep.subr.mxu0 0.0
      %303 = vmatpush1.msra.mxu0 0.0
      %304 = vmatprep.subr.mxu0 0.0
      %305 = vmatpush1.msra.mxu0 0.0
      %306 = vmatprep.subr.mxu0 0.0
      %307 = vmatpush1.msra.mxu0 0.0
      %308 = vmatprep.subr.mxu0 0.0
      %309 = vmatpush1.msra.mxu0 0.0
      %310 = vmatprep.subr.mxu0 0.0
      %311 = vmatpush1.msra.mxu0 0.0
      %312 = vmatprep.subr.mxu0 0.0
      %313 = vmatpush1.msra.mxu0 0.0
      %314 = vmatprep.subr.mxu0 0.0
      %315 = vmatpush1.msra.mxu0 0.0
      %316 = vmatprep.subr.mxu0 0.0
      %317 = vmatpush1.msra.mxu0 0.0
      %318 = vmatprep.subr.mxu0 0.0
      %319 = vmatpush1.msra.mxu0 0.0
      %320 = vmatprep.subr.mxu0 0.0
      %321 = vmatpush1.msra.mxu0 0.0
      %322 = vmatprep.subr.mxu0 0.0
      %323 = vmatpush1.msra.mxu0 0.0
      %324 = vmatprep.subr.mxu0 0.0
      %325 = vmatpush1.msra.mxu0 0.0
      %326 = vmatprep.subr.mxu0 0.0
      %327 = vmatpush1.msra.mxu0 0.0
      %328 = vmatprep.subr.mxu0 0.0
      %329 = vmatpush1.msra.mxu0 0.0
      %330 = vmatprep.subr.mxu0 0.0
      %331 = vmatpush1.msra.mxu0 0.0
      %332 = vmatprep.subr.mxu0 0.0
      %333 = vmatpush1.msra.mxu0 0.0
      %334 = vmatprep.subr.mxu0 0.0
      %335 = vmatpush1.msra.mxu0 0.0
      %336 = vmatprep.subr.mxu0 0.0
      %337 = vmatpush1.msra.mxu0 0.0
      %338 = vmatprep.mubr.f32.mxu0 0.0
      %339 = vmatmul.mubr.f32.gmra.mrb[0].mxu0 %v268
      %v340 = vpop.f32.mrb[0].mxu0
      %v341 = vadd.f32 %v264, %v340
      %v342 = vpop.f32.mrb[0].mxu0
      %v343 = vadd.f32 %v266, %v342
      %344 = vdwg.mxu0
      %345 = vrot.lane.b32.xlu0 %v173, 120
      %v346 = vpop.permute.xlu0 %345
      %347 = vrot.lane.b32.xlu0 %v171, 126
      %v348 = vpop.permute.xlu0 %347
      %349 = vrot.lane.b32.xlu0 %v179, 126
      %v350 = vpop.permute.xlu0 %349
      %351 = vrot.lane.b32.xlu0 %v172, 126
      %v352 = vpop.permute.xlu0 %351
      %vm353 = vcmask 1031168
      %v354 = vsel %vm353, %v348, %v350
      %v355 = vsel %vm353, %v350, %v352
      %v356 = vsel %vm189, %v346, 0
      %v358 = vsel %vm192, %v354, 0
      %v360 = vsel %vm192, %v355, 0
      %362 = vmatprep.subr.mxu0 %v360
      %363 = vmatpush1.msra.mxu0 %v358
      %364 = vmatprep.subr.mxu0 0.0
      %365 = vmatpush1.msra.mxu0 0.0
      %366 = vmatprep.subr.mxu0 0.0
      %367 = vmatpush1.msra.mxu0 0.0
      %368 = vmatprep.subr.mxu0 0.0
      %369 = vmatpush1.msra.mxu0 0.0
      %370 = vmatprep.subr.mxu0 0.0
      %371 = vmatpush1.msra.mxu0 0.0
      %372 = vmatprep.subr.mxu0 0.0
      %373 = vmatpush1.msra.mxu0 0.0
      %374 = vmatprep.subr.mxu0 0.0
      %375 = vmatpush1.msra.mxu0 0.0
      %376 = vmatprep.subr.mxu0 0.0
      %377 = vmatpush1.msra.mxu0 0.0
      %378 = vmatprep.subr.mxu0 0.0
      %379 = vmatpush1.msra.mxu0 0.0
      %380 = vmatprep.subr.mxu0 0.0
      %381 = vmatpush1.msra.mxu0 0.0
      %382 = vmatprep.subr.mxu0 0.0
      %383 = vmatpush1.msra.mxu0 0.0
      %384 = vmatprep.subr.mxu0 0.0
      %385 = vmatpush1.msra.mxu0 0.0
      %386 = vmatprep.subr.mxu0 0.0
      %387 = vmatpush1.msra.mxu0 0.0
      %388 = vmatprep.subr.mxu0 0.0
      %389 = vmatpush1.msra.mxu0 0.0
      %390 = vmatprep.subr.mxu0 0.0
      %391 = vmatpush1.msra.mxu0 0.0
      %392 = vmatprep.subr.mxu0 0.0
      %393 = vmatpush1.msra.mxu0 0.0
      %394 = vmatprep.subr.mxu0 0.0
      %395 = vmatpush1.msra.mxu0 0.0
      %396 = vmatprep.subr.mxu0 0.0
      %397 = vmatpush1.msra.mxu0 0.0
      %398 = vmatprep.subr.mxu0 0.0
      %399 = vmatpush1.msra.mxu0 0.0
      %400 = vmatprep.subr.mxu0 0.0
      %401 = vmatpush1.msra.mxu0 0.0
      %402 = vmatprep.subr.mxu0 0.0
      %403 = vmatpush1.msra.mxu0 0.0
      %404 = vmatprep.subr.mxu0 0.0
      %405 = vmatpush1.msra.mxu0 0.0
      %406 = vmatprep.subr.mxu0 0.0
      %407 = vmatpush1.msra.mxu0 0.0
      %408 = vmatprep.subr.mxu0 0.0
      %409 = vmatpush1.msra.mxu0 0.0
      %410 = vmatprep.subr.mxu0 0.0
      %411 = vmatpush1.msra.mxu0 0.0
      %412 = vmatprep.subr.mxu0 0.0
      %413 = vmatpush1.msra.mxu0 0.0
      %414 = vmatprep.subr.mxu0 0.0
      %415 = vmatpush1.msra.mxu0 0.0
      %416 = vmatprep.subr.mxu0 0.0
      %417 = vmatpush1.msra.mxu0 0.0
      %418 = vmatprep.subr.mxu0 0.0
      %419 = vmatpush1.msra.mxu0 0.0
      %420 = vmatprep.subr.mxu0 0.0
      %421 = vmatpush1.msra.mxu0 0.0
      %422 = vmatprep.subr.mxu0 0.0
      %423 = vmatpush1.msra.mxu0 0.0
      %424 = vmatprep.subr.mxu0 0.0
      %425 = vmatpush1.msra.mxu0 0.0
      %426 = vmatprep.mubr.f32.mxu0 0.0
      %427 = vmatmul.mubr.f32.gmra.mrb[0].mxu0 %v356
      %v428 = vpop.f32.mrb[0].mxu0
      %v429 = vadd.f32 0.0, %v428
      %v430 = vpop.f32.mrb[0].mxu0
      %v431 = vadd.f32 0.0, %v430
      %432 = vdwg.mxu0
      %v433 = vadd.f32 %v341, %v429
      %v434 = vadd.f32 %v343, %v431
      %435 = vrot.lane.b32.xlu0 %v173, 116
      %v436 = vpop.permute.xlu0 %435
      %437 = vrot.lane.b32.xlu0 %v171, 112
      %v438 = vpop.permute.xlu0 %437
      %439 = vrot.lane.b32.xlu0 %v179, 112
      %v440 = vpop.permute.xlu0 %439
      %441 = vrot.lane.b32.xlu0 %v172, 112
      %v442 = vpop.permute.xlu0 %441
      %vm443 = vcmask 916480
      %v444 = vsel %vm443, %v438, %v440
      %v445 = vsel %vm443, %v440, %v442
      %v446 = vsel %vm189, %v436, 0
      %v448 = vsel %vm192, %v444, 0
      %v450 = vsel %vm192, %v445, 0
      %452 = vmatprep.subr.mxu0 %v450
      %453 = vmatpush1.msra.mxu0 %v448
      %454 = vmatprep.subr.mxu0 0.0
      %455 = vmatpush1.msra.mxu0 0.0
      %456 = vmatprep.subr.mxu0 0.0
      %457 = vmatpush1.msra.mxu0 0.0
      %458 = vmatprep.subr.mxu0 0.0
      %459 = vmatpush1.msra.mxu0 0.0
      %460 = vmatprep.subr.mxu0 0.0
      %461 = vmatpush1.msra.mxu0 0.0
      %462 = vmatprep.subr.mxu0 0.0
      %463 = vmatpush1.msra.mxu0 0.0
      %464 = vmatprep.subr.mxu0 0.0
      %465 = vmatpush1.msra.mxu0 0.0
      %466 = vmatprep.subr.mxu0 0.0
      %467 = vmatpush1.msra.mxu0 0.0
      %468 = vmatprep.subr.mxu0 0.0
      %469 = vmatpush1.msra.mxu0 0.0
      %470 = vmatprep.subr.mxu0 0.0
      %471 = vmatpush1.msra.mxu0 0.0
      %472 = vmatprep.subr.mxu0 0.0
      %473 = vmatpush1.msra.mxu0 0.0
      %474 = vmatprep.subr.mxu0 0.0
      %475 = vmatpush1.msra.mxu0 0.0
      %476 = vmatprep.subr.mxu0 0.0
      %477 = vmatpush1.msra.mxu0 0.0
      %478 = vmatprep.subr.mxu0 0.0
      %479 = vmatpush1.msra.mxu0 0.0
      %480 = vmatprep.subr.mxu0 0.0
      %481 = vmatpush1.msra.mxu0 0.0
      %482 = vmatprep.subr.mxu0 0.0
      %483 = vmatpush1.msra.mxu0 0.0
      %484 = vmatprep.subr.mxu0 0.0
      %485 = vmatpush1.msra.mxu0 0.0
      %486 = vmatprep.subr.mxu0 0.0
      %487 = vmatpush1.msra.mxu0 0.0
      %488 = vmatprep.subr.mxu0 0.0
      %489 = vmatpush1.msra.mxu0 0.0
      %490 = vmatprep.subr.mxu0 0.0
      %491 = vmatpush1.msra.mxu0 0.0
      %492 = vmatprep.subr.mxu0 0.0
      %493 = vmatpush1.msra.mxu0 0.0
      %494 = vmatprep.subr.mxu0 0.0
      %495 = vmatpush1.msra.mxu0 0.0
      %496 = vmatprep.subr.mxu0 0.0
      %497 = vmatpush1.msra.mxu0 0.0
      %498 = vmatprep.subr.mxu0 0.0
      %499 = vmatpush1.msra.mxu0 0.0
      %500 = vmatprep.subr.mxu0 0.0
      %501 = vmatpush1.msra.mxu0 0.0
      %502 = vmatprep.subr.mxu0 0.0
      %503 = vmatpush1.msra.mxu0 0.0
      %504 = vmatprep.subr.mxu0 0.0
      %505 = vmatpush1.msra.mxu0 0.0
      %506 = vmatprep.subr.mxu0 0.0
      %507 = vmatpush1.msra.mxu0 0.0
      %508 = vmatprep.subr.mxu0 0.0
      %509 = vmatpush1.msra.mxu0 0.0
      %510 = vmatprep.subr.mxu0 0.0
      %511 = vmatpush1.msra.mxu0 0.0
      %512 = vmatprep.subr.mxu0 0.0
      %513 = vmatpush1.msra.mxu0 0.0
      %514 = vmatprep.subr.mxu0 0.0
      %515 = vmatpush1.msra.mxu0 0.0
      %516 = vmatprep.mubr.f32.mxu0 0.0
      %517 = vmatmul.mubr.f32.gmra.mrb[0].mxu0 %v446
      %v518 = vpop.f32.mrb[0].mxu0
      %v519 = vadd.f32 0.0, %v518
      %v520 = vpop.f32.mrb[0].mxu0
      %v521 = vadd.f32 0.0, %v520
      %522 = vdwg.mxu0
      %v523 = vadd.f32 %v433, %v519
      %v524 = vadd.f32 %v434, %v521
      %525 = vrot.lane.b32.xlu0 %v173, 112
      %v526 = vpop.permute.xlu0 %525
      %527 = vrot.lane.b32.xlu0 %v171, 111
      %v528 = vpop.permute.xlu0 %527
      %529 = vrot.lane.b32.xlu0 %v179, 111
      %v530 = vpop.permute.xlu0 %529
      %531 = vrot.lane.b32.xlu0 %v172, 111
      %v532 = vpop.permute.xlu0 %531
      %vm533 = vcmask 908288
      %v534 = vsel %vm533, %v528, %v530
      %v535 = vsel %vm533, %v530, %v532
      %v536 = vsel %vm189, %v526, 0
      %v538 = vsel %vm192, %v534, 0
      %v540 = vsel %vm192, %v535, 0
      %542 = vmatprep.subr.mxu0 %v540
      %543 = vmatpush1.msra.mxu0 %v538
      %544 = vmatprep.subr.mxu0 0.0
      %545 = vmatpush1.msra.mxu0 0.0
      %546 = vmatprep.subr.mxu0 0.0
      %547 = vmatpush1.msra.mxu0 0.0
      %548 = vmatprep.subr.mxu0 0.0
      %549 = vmatpush1.msra.mxu0 0.0
      %550 = vmatprep.subr.mxu0 0.0
      %551 = vmatpush1.msra.mxu0 0.0
      %552 = vmatprep.subr.mxu0 0.0
      %553 = vmatpush1.msra.mxu0 0.0
      %554 = vmatprep.subr.mxu0 0.0
      %555 = vmatpush1.msra.mxu0 0.0
      %556 = vmatprep.subr.mxu0 0.0
      %557 = vmatpush1.msra.mxu0 0.0
      %558 = vmatprep.subr.mxu0 0.0
      %559 = vmatpush1.msra.mxu0 0.0
      %560 = vmatprep.subr.mxu0 0.0
      %561 = vmatpush1.msra.mxu0 0.0
      %562 = vmatprep.subr.mxu0 0.0
      %563 = vmatpush1.msra.mxu0 0.0
      %564 = vmatprep.subr.mxu0 0.0
      %565 = vmatpush1.msra.mxu0 0.0
      %566 = vmatprep.subr.mxu0 0.0
      %567 = vmatpush1.msra.mxu0 0.0
      %568 = vmatprep.subr.mxu0 0.0
      %569 = vmatpush1.msra.mxu0 0.0
      %570 = vmatprep.subr.mxu0 0.0
      %571 = vmatpush1.msra.mxu0 0.0
      %572 = vmatprep.subr.mxu0 0.0
      %573 = vmatpush1.msra.mxu0 0.0
      %574 = vmatprep.subr.mxu0 0.0
      %575 = vmatpush1.msra.mxu0 0.0
      %576 = vmatprep.subr.mxu0 0.0
      %577 = vmatpush1.msra.mxu0 0.0
      %578 = vmatprep.subr.mxu0 0.0
      %579 = vmatpush1.msra.mxu0 0.0
      %580 = vmatprep.subr.mxu0 0.0
      %581 = vmatpush1.msra.mxu0 0.0
      %582 = vmatprep.subr.mxu0 0.0
      %583 = vmatpush1.msra.mxu0 0.0
      %584 = vmatprep.subr.mxu0 0.0
      %585 = vmatpush1.msra.mxu0 0.0
      %586 = vmatprep.subr.mxu0 0.0
      %587 = vmatpush1.msra.mxu0 0.0
      %588 = vmatprep.subr.mxu0 0.0
      %589 = vmatpush1.msra.mxu0 0.0
      %590 = vmatprep.subr.mxu0 0.0
      %591 = vmatpush1.msra.mxu0 0.0
      %592 = vmatprep.subr.mxu0 0.0
      %593 = vmatpush1.msra.mxu0 0.0
      %594 = vmatprep.subr.mxu0 0.0
      %595 = vmatpush1.msra.mxu0 0.0
      %596 = vmatprep.subr.mxu0 0.0
      %597 = vmatpush1.msra.mxu0 0.0
      %598 = vmatprep.subr.mxu0 0.0
      %599 = vmatpush1.msra.mxu0 0.0
      %600 = vmatprep.subr.mxu0 0.0
      %601 = vmatpush1.msra.mxu0 0.0
      %602 = vmatprep.subr.mxu0 0.0
      %603 = vmatpush1.msra.mxu0 0.0
      %604 = vmatprep.subr.mxu0 0.0
      %605 = vmatpush1.msra.mxu0 0.0
      %606 = vmatprep.mubr.f32.mxu0 0.0
      %607 = vmatmul.mubr.f32.gmra.mrb[0].mxu0 %v536
      %v608 = vpop.f32.mrb[0].mxu0
      %v609 = vadd.f32 0.0, %v608
      %v610 = vpop.f32.mrb[0].mxu0
      %v611 = vadd.f32 0.0, %v610
      %612 = vdwg.mxu0
      %v613 = vadd.f32 %v523, %v609
      %v614 = vadd.f32 %v524, %v611
      %615 = vrot.lane.b32.xlu0 %v173, 108
      %v616 = vpop.permute.xlu0 %615
      %617 = vrot.lane.b32.xlu0 %v171, 110
      %v618 = vpop.permute.xlu0 %617
      %619 = vrot.lane.b32.xlu0 %v179, 110
      %v620 = vpop.permute.xlu0 %619
      %621 = vrot.lane.b32.xlu0 %v172, 110
      %v622 = vpop.permute.xlu0 %621
      %vm623 = vcmask 900096
      %v624 = vsel %vm623, %v618, %v620
      %v625 = vsel %vm623, %v620, %v622
      %v626 = vsel %vm189, %v616, 0
      %v628 = vsel %vm192, %v624, 0
      %v630 = vsel %vm192, %v625, 0
      %632 = vmatprep.subr.mxu0 %v630
      %633 = vmatpush1.msra.mxu0 %v628
      %634 = vmatprep.subr.mxu0 0.0
      %635 = vmatpush1.msra.mxu0 0.0
      %636 = vmatprep.subr.mxu0 0.0
      %637 = vmatpush1.msra.mxu0 0.0
      %638 = vmatprep.subr.mxu0 0.0
      %639 = vmatpush1.msra.mxu0 0.0
      %640 = vmatprep.subr.mxu0 0.0
      %641 = vmatpush1.msra.mxu0 0.0
      %642 = vmatprep.subr.mxu0 0.0
      %643 = vmatpush1.msra.mxu0 0.0
      %644 = vmatprep.subr.mxu0 0.0
      %645 = vmatpush1.msra.mxu0 0.0
      %646 = vmatprep.subr.mxu0 0.0
      %647 = vmatpush1.msra.mxu0 0.0
      %648 = vmatprep.subr.mxu0 0.0
      %649 = vmatpush1.msra.mxu0 0.0
      %650 = vmatprep.subr.mxu0 0.0
      %651 = vmatpush1.msra.mxu0 0.0
      %652 = vmatprep.subr.mxu0 0.0
      %653 = vmatpush1.msra.mxu0 0.0
      %654 = vmatprep.subr.mxu0 0.0
      %655 = vmatpush1.msra.mxu0 0.0
      %656 = vmatprep.subr.mxu0 0.0
      %657 = vmatpush1.msra.mxu0 0.0
      %658 = vmatprep.subr.mxu0 0.0
      %659 = vmatpush1.msra.mxu0 0.0
      %660 = vmatprep.subr.mxu0 0.0
      %661 = vmatpush1.msra.mxu0 0.0
      %662 = vmatprep.subr.mxu0 0.0
      %663 = vmatpush1.msra.mxu0 0.0
      %664 = vmatprep.subr.mxu0 0.0
      %665 = vmatpush1.msra.mxu0 0.0
      %666 = vmatprep.subr.mxu0 0.0
      %667 = vmatpush1.msra.mxu0 0.0
      %668 = vmatprep.subr.mxu0 0.0
      %669 = vmatpush1.msra.mxu0 0.0
      %670 = vmatprep.subr.mxu0 0.0
      %671 = vmatpush1.msra.mxu0 0.0
      %672 = vmatprep.subr.mxu0 0.0
      %673 = vmatpush1.msra.mxu0 0.0
      %674 = vmatprep.subr.mxu0 0.0
      %675 = vmatpush1.msra.mxu0 0.0
      %676 = vmatprep.subr.mxu0 0.0
      %677 = vmatpush1.msra.mxu0 0.0
      %678 = vmatprep.subr.mxu0 0.0
      %679 = vmatpush1.msra.mxu0 0.0
      %680 = vmatprep.subr.mxu0 0.0
      %681 = vmatpush1.msra.mxu0 0.0
      %682 = vmatprep.subr.mxu0 0.0
      %683 = vmatpush1.msra.mxu0 0.0
      %684 = vmatprep.subr.mxu0 0.0
      %685 = vmatpush1.msra.mxu0 0.0
      %686 = vmatprep.subr.mxu0 0.0
      %687 = vmatpush1.msra.mxu0 0.0
      %688 = vmatprep.subr.mxu0 0.0
      %689 = vmatpush1.msra.mxu0 0.0
      %690 = vmatprep.subr.mxu0 0.0
      %691 = vmatpush1.msra.mxu0 0.0
      %692 = vmatprep.subr.mxu0 0.0
      %693 = vmatpush1.msra.mxu0 0.0
      %694 = vmatprep.subr.mxu0 0.0
      %695 = vmatpush1.msra.mxu0 0.0
      %696 = vmatprep.mubr.f32.mxu0 0.0
      %697 = vmatmul.mubr.f32.gmra.mrb[0].mxu0 %v626
      %v698 = vpop.f32.mrb[0].mxu0
      %v699 = vadd.f32 0.0, %v698
      %v700 = vpop.f32.mrb[0].mxu0
      %v701 = vadd.f32 0.0, %v700
      %702 = vdwg.mxu0
      %v703 = vadd.f32 %v613, %v699
      %v704 = vadd.f32 %v614, %v701
      %705 = vrot.lane.b32.xlu0 %v173, 104
      %v706 = vpop.permute.xlu0 %705
      %707 = vrot.lane.b32.xlu0 %v171, 96
      %v708 = vpop.permute.xlu0 %707
      %709 = vrot.lane.b32.xlu0 %v179, 96
      %v710 = vpop.permute.xlu0 %709
      %711 = vrot.lane.b32.xlu0 %v172, 96
      %v712 = vpop.permute.xlu0 %711
      %vm713 = vcmask 785408
      %v714 = vsel %vm713, %v708, %v710
      %v715 = vsel %vm713, %v710, %v712
      %v716 = vsel %vm189, %v706, 0
      %v718 = vsel %vm192, %v714, 0
      %v720 = vsel %vm192, %v715, 0
      %722 = vmatprep.subr.mxu0 %v720
      %723 = vmatpush1.msra.mxu0 %v718
      %724 = vmatprep.subr.mxu0 0.0
      %725 = vmatpush1.msra.mxu0 0.0
      %726 = vmatprep.subr.mxu0 0.0
      %727 = vmatpush1.msra.mxu0 0.0
      %728 = vmatprep.subr.mxu0 0.0
      %729 = vmatpush1.msra.mxu0 0.0
      %730 = vmatprep.subr.mxu0 0.0
      %731 = vmatpush1.msra.mxu0 0.0
      %732 = vmatprep.subr.mxu0 0.0
      %733 = vmatpush1.msra.mxu0 0.0
      %734 = vmatprep.subr.mxu0 0.0
      %735 = vmatpush1.msra.mxu0 0.0
      %736 = vmatprep.subr.mxu0 0.0
      %737 = vmatpush1.msra.mxu0 0.0
      %738 = vmatprep.subr.mxu0 0.0
      %739 = vmatpush1.msra.mxu0 0.0
      %740 = vmatprep.subr.mxu0 0.0
      %741 = vmatpush1.msra.mxu0 0.0
      %742 = vmatprep.subr.mxu0 0.0
      %743 = vmatpush1.msra.mxu0 0.0
      %744 = vmatprep.subr.mxu0 0.0
      %745 = vmatpush1.msra.mxu0 0.0
      %746 = vmatprep.subr.mxu0 0.0
      %747 = vmatpush1.msra.mxu0 0.0
      %748 = vmatprep.subr.mxu0 0.0
      %749 = vmatpush1.msra.mxu0 0.0
      %750 = vmatprep.subr.mxu0 0.0
      %751 = vmatpush1.msra.mxu0 0.0
      %752 = vmatprep.subr.mxu0 0.0
      %753 = vmatpush1.msra.mxu0 0.0
      %754 = vmatprep.subr.mxu0 0.0
      %755 = vmatpush1.msra.mxu0 0.0
      %756 = vmatprep.subr.mxu0 0.0
      %757 = vmatpush1.msra.mxu0 0.0
      %758 = vmatprep.subr.mxu0 0.0
      %759 = vmatpush1.msra.mxu0 0.0
      %760 = vmatprep.subr.mxu0 0.0
      %761 = vmatpush1.msra.mxu0 0.0
      %762 = vmatprep.subr.mxu0 0.0
      %763 = vmatpush1.msra.mxu0 0.0
      %764 = vmatprep.subr.mxu0 0.0
      %765 = vmatpush1.msra.mxu0 0.0
      %766 = vmatprep.subr.mxu0 0.0
      %767 = vmatpush1.msra.mxu0 0.0
      %768 = vmatprep.subr.mxu0 0.0
      %769 = vmatpush1.msra.mxu0 0.0
      %770 = vmatprep.subr.mxu0 0.0
      %771 = vmatpush1.msra.mxu0 0.0
      %772 = vmatprep.subr.mxu0 0.0
      %773 = vmatpush1.msra.mxu0 0.0
      %774 = vmatprep.subr.mxu0 0.0
      %775 = vmatpush1.msra.mxu0 0.0
      %776 = vmatprep.subr.mxu0 0.0
      %777 = vmatpush1.msra.mxu0 0.0
      %778 = vmatprep.subr.mxu0 0.0
      %779 = vmatpush1.msra.mxu0 0.0
      %780 = vmatprep.subr.mxu0 0.0
      %781 = vmatpush1.msra.mxu0 0.0
      %782 = vmatprep.subr.mxu0 0.0
      %783 = vmatpush1.msra.mxu0 0.0
      %784 = vmatprep.subr.mxu0 0.0
      %785 = vmatpush1.msra.mxu0 0.0
      %786 = vmatprep.mubr.f32.mxu0 0.0
      %787 = vmatmul.mubr.f32.gmra.mrb[0].mxu0 %v716
      %v788 = vpop.f32.mrb[0].mxu0
      %v789 = vadd.f32 0.0, %v788
      %v790 = vpop.f32.mrb[0].mxu0
      %v791 = vadd.f32 0.0, %v790
      %792 = vdwg.mxu0
      %v793 = vadd.f32 %v703, %v789
      %v794 = vadd.f32 %v704, %v791
      %795 = vrot.lane.b32.xlu0 %v173, 100
      %v796 = vpop.permute.xlu0 %795
      %797 = vrot.lane.b32.xlu0 %v171, 95
      %v798 = vpop.permute.xlu0 %797
      %799 = vrot.lane.b32.xlu0 %v179, 95
      %v800 = vpop.permute.xlu0 %799
      %801 = vrot.lane.b32.xlu0 %v172, 95
      %v802 = vpop.permute.xlu0 %801
      %vm803 = vcmask 777216
      %v804 = vsel %vm803, %v798, %v800
      %v805 = vsel %vm803, %v800, %v802
      %v806 = vsel %vm189, %v796, 0
      %v808 = vsel %vm192, %v804, 0
      %v810 = vsel %vm192, %v805, 0
      %812 = vmatprep.subr.mxu0 %v810
      %813 = vmatpush1.msra.mxu0 %v808
      %814 = vmatprep.subr.mxu0 0.0
      %815 = vmatpush1.msra.mxu0 0.0
      %816 = vmatprep.subr.mxu0 0.0
      %817 = vmatpush1.msra.mxu0 0.0
      %818 = vmatprep.subr.mxu0 0.0
      %819 = vmatpush1.msra.mxu0 0.0
      %820 = vmatprep.subr.mxu0 0.0
      %821 = vmatpush1.msra.mxu0 0.0
      %822 = vmatprep.subr.mxu0 0.0
      %823 = vmatpush1.msra.mxu0 0.0
      %824 = vmatprep.subr.mxu0 0.0
      %825 = vmatpush1.msra.mxu0 0.0
      %826 = vmatprep.subr.mxu0 0.0
      %827 = vmatpush1.msra.mxu0 0.0
      %828 = vmatprep.subr.mxu0 0.0
      %829 = vmatpush1.msra.mxu0 0.0
      %830 = vmatprep.subr.mxu0 0.0
      %831 = vmatpush1.msra.mxu0 0.0
      %832 = vmatprep.subr.mxu0 0.0
      %833 = vmatpush1.msra.mxu0 0.0
      %834 = vmatprep.subr.mxu0 0.0
      %835 = vmatpush1.msra.mxu0 0.0
      %836 = vmatprep.subr.mxu0 0.0
      %837 = vmatpush1.msra.mxu0 0.0
      %838 = vmatprep.subr.mxu0 0.0
      %839 = vmatpush1.msra.mxu0 0.0
      %840 = vmatprep.subr.mxu0 0.0
      %841 = vmatpush1.msra.mxu0 0.0
      %842 = vmatprep.subr.mxu0 0.0
      %843 = vmatpush1.msra.mxu0 0.0
      %844 = vmatprep.subr.mxu0 0.0
      %845 = vmatpush1.msra.mxu0 0.0
      %846 = vmatprep.subr.mxu0 0.0
      %847 = vmatpush1.msra.mxu0 0.0
      %848 = vmatprep.subr.mxu0 0.0
      %849 = vmatpush1.msra.mxu0 0.0
      %850 = vmatprep.subr.mxu0 0.0
      %851 = vmatpush1.msra.mxu0 0.0
      %852 = vmatprep.subr.mxu0 0.0
      %853 = vmatpush1.msra.mxu0 0.0
      %854 = vmatprep.subr.mxu0 0.0
      %855 = vmatpush1.msra.mxu0 0.0
      %856 = vmatprep.subr.mxu0 0.0
      %857 = vmatpush1.msra.mxu0 0.0
      %858 = vmatprep.subr.mxu0 0.0
      %859 = vmatpush1.msra.mxu0 0.0
      %860 = vmatprep.subr.mxu0 0.0
      %861 = vmatpush1.msra.mxu0 0.0
      %862 = vmatprep.subr.mxu0 0.0
      %863 = vmatpush1.msra.mxu0 0.0
      %864 = vmatprep.subr.mxu0 0.0
      %865 = vmatpush1.msra.mxu0 0.0
      %866 = vmatprep.subr.mxu0 0.0
      %867 = vmatpush1.msra.mxu0 0.0
      %868 = vmatprep.subr.mxu0 0.0
      %869 = vmatpush1.msra.mxu0 0.0
      %870 = vmatprep.subr.mxu0 0.0
      %871 = vmatpush1.msra.mxu0 0.0
      %872 = vmatprep.subr.mxu0 0.0
      %873 = vmatpush1.msra.mxu0 0.0
      %874 = vmatprep.subr.mxu0 0.0
      %875 = vmatpush1.msra.mxu0 0.0
      %876 = vmatprep.mubr.f32.mxu0 0.0
      %877 = vmatmul.mubr.f32.gmra.mrb[0].mxu0 %v806
      %v878 = vpop.f32.mrb[0].mxu0
      %v879 = vadd.f32 0.0, %v878
      %v880 = vpop.f32.mrb[0].mxu0
      %v881 = vadd.f32 0.0, %v880
      %882 = vdwg.mxu0
      %v883 = vadd.f32 %v793, %v879
      %v884 = vadd.f32 %v794, %v881
      %885 = vrot.lane.b32.xlu0 %v173, 96
      %v886 = vpop.permute.xlu0 %885
      %887 = vrot.lane.b32.xlu0 %v171, 94
      %v888 = vpop.permute.xlu0 %887
      %889 = vrot.lane.b32.xlu0 %v179, 94
      %v890 = vpop.permute.xlu0 %889
      %891 = vrot.lane.b32.xlu0 %v172, 94
      %v892 = vpop.permute.xlu0 %891
      %vm893 = vcmask 769024
      %v894 = vsel %vm893, %v888, %v890
      %v895 = vsel %vm893, %v890, %v892
      %v896 = vsel %vm189, %v886, 0
      %v898 = vsel %vm192, %v894, 0
      %v900 = vsel %vm192, %v895, 0
      %902 = vmatprep.subr.mxu0 %v900
      %903 = vmatpush1.msra.mxu0 %v898
      %904 = vmatprep.subr.mxu0 0.0
      %905 = vmatpush1.msra.mxu0 0.0
      %906 = vmatprep.subr.mxu0 0.0
      %907 = vmatpush1.msra.mxu0 0.0
      %908 = vmatprep.subr.mxu0 0.0
      %909 = vmatpush1.msra.mxu0 0.0
      %910 = vmatprep.subr.mxu0 0.0
      %911 = vmatpush1.msra.mxu0 0.0
      %912 = vmatprep.subr.mxu0 0.0
      %913 = vmatpush1.msra.mxu0 0.0
      %914 = vmatprep.subr.mxu0 0.0
      %915 = vmatpush1.msra.mxu0 0.0
      %916 = vmatprep.subr.mxu0 0.0
      %917 = vmatpush1.msra.mxu0 0.0
      %918 = vmatprep.subr.mxu0 0.0
      %919 = vmatpush1.msra.mxu0 0.0
      %920 = vmatprep.subr.mxu0 0.0
      %921 = vmatpush1.msra.mxu0 0.0
      %922 = vmatprep.subr.mxu0 0.0
      %923 = vmatpush1.msra.mxu0 0.0
      %924 = vmatprep.subr.mxu0 0.0
      %925 = vmatpush1.msra.mxu0 0.0
      %926 = vmatprep.subr.mxu0 0.0
      %927 = vmatpush1.msra.mxu0 0.0
      %928 = vmatprep.subr.mxu0 0.0
      %929 = vmatpush1.msra.mxu0 0.0
      %930 = vmatprep.subr.mxu0 0.0
      %931 = vmatpush1.msra.mxu0 0.0
      %932 = vmatprep.subr.mxu0 0.0
      %933 = vmatpush1.msra.mxu0 0.0
      %934 = vmatprep.subr.mxu0 0.0
      %935 = vmatpush1.msra.mxu0 0.0
      %936 = vmatprep.subr.mxu0 0.0
      %937 = vmatpush1.msra.mxu0 0.0
      %938 = vmatprep.subr.mxu0 0.0
      %939 = vmatpush1.msra.mxu0 0.0
      %940 = vmatprep.subr.mxu0 0.0
      %941 = vmatpush1.msra.mxu0 0.0
      %942 = vmatprep.subr.mxu0 0.0
      %943 = vmatpush1.msra.mxu0 0.0
      %944 = vmatprep.subr.mxu0 0.0
      %945 = vmatpush1.msra.mxu0 0.0
      %946 = vmatprep.subr.mxu0 0.0
      %947 = vmatpush1.msra.mxu0 0.0
      %948 = vmatprep.subr.mxu0 0.0
      %949 = vmatpush1.msra.mxu0 0.0
      %950 = vmatprep.subr.mxu0 0.0
      %951 = vmatpush1.msra.mxu0 0.0
      %952 = vmatprep.subr.mxu0 0.0
      %953 = vmatpush1.msra.mxu0 0.0
      %954 = vmatprep.subr.mxu0 0.0
      %955 = vmatpush1.msra.mxu0 0.0
      %956 = vmatprep.subr.mxu0 0.0
      %957 = vmatpush1.msra.mxu0 0.0
      %958 = vmatprep.subr.mxu0 0.0
      %959 = vmatpush1.msra.mxu0 0.0
      %960 = vmatprep.subr.mxu0 0.0
      %961 = vmatpush1.msra.mxu0 0.0
      %962 = vmatprep.subr.mxu0 0.0
      %963 = vmatpush1.msra.mxu0 0.0
      %964 = vmatprep.subr.mxu0 0.0
      %965 = vmatpush1.msra.mxu0 0.0
      %966 = vmatprep.mubr.f32.mxu0 0.0
      %967 = vmatmul.mubr.f32.gmra.mrb[0].mxu0 %v896
      %v968 = vpop.f32.mrb[0].mxu0
      %v969 = vadd.f32 0.0, %v968
      %v970 = vpop.f32.mrb[0].mxu0
      %v971 = vadd.f32 0.0, %v970
      %972 = vdwg.mxu0
      %v973 = vadd.f32 %v883, %v969
      %v974 = vadd.f32 %v884, %v971
      %v975 = vld [vmem:[%s2] sm:$0xff]
      %977 = vset.pattern.permute.xlu0 0
      %978 = vperm.xlu0 %977, %v975
      %v979 = vpop.permute.xlu0 %978
      %v981 = vmul.f32 %v973, %v979
      %v982 = vmul.f32 %v974, %v979
      %983 = vset.pattern.permute.xlu0 1
      %984 = vperm.xlu0 %983, %v975
      %v985 = vpop.permute.xlu0 %984
      %v987 = vadd.f32 %v981, %v985
      %v988 = vadd.f32 %v982, %v985
      %v989 = vmax.f32 %v987, 0.0
      %v990 = vmax.f32 %v988, 0.0
      %991 = vst [vmem:[%s170] sm:$0xff] %v989
      %992 = vst [vmem:[%s170 + $0x8] sm:$0xff] %v990
      %p993 = scmp.lt.s32.totalorder %s14, 1
      %s994 = scalar_select %p993, %s14, 1
      %s995 = smul.addr %s994, 2
      %s996 = smul.addr %s995, 8
      %s997 = scalar_lea.vmem %s3, %s996
      // Predicated region
      $region33: #{conv_block_forward.3} parent=31 // pred_check
        %p998 = pneg %p100
      $region34: #{conv_block_forward.3} parent=31 // pred_check_branch
        %1000 = sbr.rel (%p998) target = $region36
      $region35: #{conv_block_forward.3} parent=31 // pred_region
        _
      $region36: #{conv_block_forward.3} parent=31 // pred_fallthru
        _
    $region32: #{conv_block_forward.3} parent=5 // pred_fallthru
      _
    %p1001 = scmp.le.s32.totalorder 2, %s9
    // Predicated region
    $region37: #{conv_block_forward.3} parent=5 // pred_check
      %p1002 = pneg %p1001
    $region38: #{conv_block_forward.3} parent=5 // pred_check_branch
      %1004 = sbr.rel (%p1002) target = $region40
    $region39: #{conv_block_forward.3} parent=5 // pred_region
      %s1005 = ssub.s32 %s9, 2
      // Predicated region
      $region41: #{conv_block_forward.3} parent=39 // pred_check
        %p1006 = pneg %p106
      $region42: #{conv_block_forward.3} parent=39 // pred_check_branch
        %1008 = sbr.rel (%p1006) target = $region44
      $region43: #{conv_block_forward.3} parent=39 // pred_region
        %p1009 = scmp.lt.s32.totalorder %s15, 1
        %s1010 = scalar_select %p1009, %s15, 1
        %s1011 = smul.addr %s1010, 2
        %s1012 = smul.addr %s1011, 8
        %s1013 = scalar_lea.vmem %s3, %s1012
      $region44: #{conv_block_forward.3} parent=39 // pred_fallthru
        _
    $region40: #{conv_block_forward.3} parent=5 // pred_fallthru
      _
  $region6: #{conv_block_forward.3} parent=0 // loop_footer
    %s13 = sadd.s32 1, %s9
  $region7: #{conv_block_forward.3} parent=0 // loop_footer_branch
    %8 = sbr.rel target = $region3
  $region8: #{conv_block_forward.3} parent=0 // loop_exit
    _

// kernel: conv_block_forward.2
$region0: #{conv_block_forward.2}
  #allocation0 [shape = 'u32[]', space=smem, size = 0x4, offset = 0x4, fixed_abs, tag = 'smem constant byte address 0x4 - core index']
  #allocation1 [shape = 'u32[144,128]{1,0:T(1,128)}', space=vmem, size = 0x12000, scoped, tag = 'internal scratch']
  %s0 = inlined_call_operand.vmem [shape: f32[2,4,384], index: 0, kind: input, shape index: {}]
  %s1 = inlined_call_operand.vmem [shape: f32[8,36], index: 1, kind: input, shape index: {}]
  %s2 = inlined_call_operand.vmem [shape: f32[1,256], index: 2, kind: input, shape index: {}]
  %s3 = inlined_call_operand.vmem [shape: f32[2,8,2], index: 3, kind: output, shape index: {}]
  %s4 = sld [smem:[#allocation0]]
  $region45: #{conv_block_forward.2} parent=0
    _
  %s6 = ssub.s32 1, %s4
  %s7 = scalar_select 0, %s6, %s4
  loop: start=0, step=1, limit=4
  $region2: #{conv_block_forward.2} parent=0 // loop_pre_header
    _
  $region3: #{conv_block_forward.2} parent=0 // loop_header
    %s9 = sphi 0, %s13
    %p10 = scmp.ge.s32.totalorder %s9, 4
    %s19 = sphi 0, %s21
    %s22 = sphi 0, %s19
    %s23 = sphi 0, %s22
    %s39 = sphi 0, %s23
    %s43 = sphi 0, %s43
    %s45 = sphi 0, %s43
    %s46 = sphi 0, %s45
    %s60 = sphi 0, %s46
    %s64 = sphi 0, %s64
    %s66 = sphi 0, %s64
    %s67 = sphi 0, %s66
    %s81 = sphi 0, %s67
    %s87 = sphi 0, %s89
    %s90 = sphi 0, %s87
    %s91 = sphi 0, %s90
    %s107 = sphi 0, %s91
  $region4: #{conv_block_forward.2} parent=0 // loop_header_branch
    %12 = sbr.rel (%p10) target = $region8
  $region5: #{conv_block_forward.2} parent=0 // loop_body
    %s14 = ssub.s32 %s9, 1
    %s15 = ssub.s32 %s9, 2
    %s16 = sadd.s32 %s9, 1
    %s17 = ssub.s32 %s9, %s16
    %p18 = scmp.eq.s32.totalorder %s17, 0
    %s20 = sadd.s32 %s19, 1
    %s21 = scalar_select %p18, %s19, %s20
    %p24 = pneg %p18
    %p25 = scmp.eq.s32.totalorder %s9, 1
    %p26 = por %p24, %p25
    %p27 = scmp.ne.s32.totalorder %s19, %s22
    %p28 = scmp.eq.s32.totalorder %s9, 0
    %p29 = por %p27, %p28
    %p30 = scmp.ne.s32.totalorder %s19, %s22
    %p31 = scmp.eq.s32.totalorder %s14, 1
    %p32 = por %p30, %p31
    %p33 = scmp.ne.s32.totalorder %s22, %s23
    %p34 = scmp.eq.s32.totalorder %s14, 0
    %p35 = por %p33, %p34
    %p36 = scmp.ne.s32.totalorder %s22, %s23
    %p37 = scmp.eq.s32.totalorder %s15, 1
    %p38 = por %p36, %p37
    %p40 = scmp.ne.s32.totalorder %s23, %s39
    %p41 = scmp.eq.s32.totalorder %s15, 0
    %p42 = por %p40, %p41
    %s44 = sadd.s32 %s43, 1
    %p47 = scmp.eq.s32.totalorder %s9, 1
    %p48 = scmp.ne.s32.totalorder %s43, %s45
    %p49 = scmp.eq.s32.totalorder %s9, 0
    %p50 = por %p48, %p49
    %p51 = scmp.ne.s32.totalorder %s43, %s45
    %p52 = scmp.eq.s32.totalorder %s14, 1
    %p53 = por %p51, %p52
    %p54 = scmp.ne.s32.totalorder %s45, %s46
    %p55 = scmp.eq.s32.totalorder %s14, 0
    %p56 = por %p54, %p55
    %p57 = scmp.ne.s32.totalorder %s45, %s46
    %p58 = scmp.eq.s32.totalorder %s15, 1
    %p59 = por %p57, %p58
    %p61 = scmp.ne.s32.totalorder %s46, %s60
    %p62 = scmp.eq.s32.totalorder %s15, 0
    %p63 = por %p61, %p62
    %s65 = sadd.s32 %s64, 1
    %p68 = scmp.eq.s32.totalorder %s9, 1
    %p69 = scmp.ne.s32.totalorder %s64, %s66
    %p70 = scmp.eq.s32.totalorder %s9, 0
    %p71 = por %p69, %p70
    %p72 = scmp.ne.s32.totalorder %s64, %s66
    %p73 = scmp.eq.s32.totalorder %s14, 1
    %p74 = por %p72, %p73
    %p75 = scmp.ne.s32.totalorder %s66, %s67
    %p76 = scmp.eq.s32.totalorder %s14, 0
    %p77 = por %p75, %p76
    %p78 = scmp.ne.s32.totalorder %s66, %s67
    %p79 = scmp.eq.s32.totalorder %s15, 1
    %p80 = por %p78, %p79
    %p82 = scmp.ne.s32.totalorder %s67, %s81
    %p83 = scmp.eq.s32.totalorder %s15, 0
    %p84 = por %p82, %p83
    %s85 = ssub.s32 %s9, %s16
    %p86 = scmp.eq.s32.totalorder %s85, 0
    %s88 = sadd.s32 %s87, 1
    %s89 = scalar_select %p86, %s87, %s88
    %p92 = pneg %p86
    %p93 = scmp.eq.s32.totalorder %s9, 1
    %p94 = por %p92, %p93
    %p95 = scmp.ne.s32.totalorder %s87, %s90
    %p96 = scmp.eq.s32.totalorder %s9, 0
    %p97 = por %p95, %p96
    %p98 = scmp.ne.s32.totalorder %s87, %s90
    %p99 = scmp.eq.s32.totalorder %s14, 1
    %p100 = por %p98, %p99
    %p101 = scmp.ne.s32.totalorder %s90, %s91
    %p102 = scmp.eq.s32.totalorder %s14, 0
    %p103 = por %p101, %p102
    %p104 = scmp.ne.s32.totalorder %s90, %s91
    %p105 = scmp.eq.s32.totalorder %s15, 1
    %p106 = por %p104, %p105
    %p108 = scmp.ne.s32.totalorder %s91, %s107
    %p109 = scmp.eq.s32.totalorder %s15, 0
    %p110 = por %p108, %p109
    %p111 = scmp.le.s32.totalorder 1, %s9
    %p112 = scmp.lt.s32.totalorder %s9, 3
    %p113 = pnand %p111, %p112
    %p114 = pneg %p113
    // Predicated region
    $region9: #{conv_block_forward.2} parent=5 // pred_check
      _
    $region10: #{conv_block_forward.2} parent=5 // pred_check_branch
      %116 = sbr.rel (%p113) target = $region12
    $region11: #{conv_block_forward.2} parent=5 // pred_region
      %s117 = ssub.s32 %s9, 1
      // Predicated region
      $region13: #{conv_block_forward.2} parent=11 // pred_check
        %p118 = pneg %p56
      $region14: #{conv_block_forward.2} parent=11 // pred_check_branch
        %120 = sbr.rel (%p118) target = $region16
      $region15: #{conv_block_forward.2} parent=11 // pred_region
        _
      $region16: #{conv_block_forward.2} parent=11 // pred_fallthru
        _
      // Predicated region
      $region17: #{conv_block_forward.2} parent=11 // pred_check
        %p121 = pneg %p77
      $region18: #{conv_block_forward.2} parent=11 // pred_check_branch
        %123 = sbr.rel (%p121) target = $region20
      $region19: #{conv_block_forward.2} parent=11 // pred_region
        _
      $region20: #{conv_block_forward.2} parent=11 // pred_fallthru
        _
    $region12: #{conv_block_forward.2} parent=5 // pred_fallthru
      _
    %p124 = scmp.lt.s32.totalorder %s9, 2
    // Predicated region
    $region21: #{conv_block_forward.2} parent=5 // pred_check
      %p125 = pneg %p124
    $region22: #{conv_block_forward.2} parent=5 // pred_check_branch
      %127 = sbr.rel (%p125) target = $region24
    $region23: #{conv_block_forward.2} parent=5 // pred_region
      // Predicated region
      $region25: #{conv_block_forward.2} parent=23 // pred_check
        %p128 = pneg %p29
      $region26: #{conv_block_forward.2} parent=23 // pred_check_branch
        %130 = sbr.rel (%p128) target = $region28
      $region27: #{conv_block_forward.2} parent=23 // pred_region
        %p131 = scmp.lt.s32.totalorder %s9, 1
        %s132 = scalar_select %p131, %s9, 1
        %s133 = smul.addr %s132, 3
        %s134 = smul.addr %s133, 4
        %s135 = scalar_lea.vmem %s0, %s134
      $region28: #{conv_block_forward.2} parent=23 // pred_fallthru
        _
    $region24: #{conv_block_forward.2} parent=5 // pred_fallthru
      _
    %p136 = scmp.le.s32.totalorder 1, %s9
    %p137 = scmp.lt.s32.totalorder %s9, 3
    %p138 = pnand %p136, %p137
    %p139 = pneg %p138
    // Predicated region
    $region29: #{conv_block_forward.2} parent=5 // pred_check
      _
    $region30: #{conv_block_forward.2} parent=5 // pred_check_branch
      %141 = sbr.rel (%p138) target = $region32
    $region31: #{conv_block_forward.2} parent=5 // pred_region
      %s142 = ssub.s32 %s9, 1
      %p143 = scmp.lt.s32.totalorder %s14, 1
      %s144 = scalar_select %p143, %s14, 1
      %s145 = smul.addr %s144, 3
      %s146 = smul.addr %s145, 4
      %s147 = scalar_lea.vmem %s0, %s146
      %p148 = pneg %p35
      %p149 = pneg %p32
      %p150 = pneg %p56
      %p151 = pneg %p53
      %p152 = pneg %p77
      %p153 = pneg %p74
      %p154 = pneg %p103
      %p155 = pneg %p100
      %p156 = scmp.lt.s32.totalorder %s14, 1
      %s157 = scalar_select %p156, %s14, 1
      %s158 = smul.addr %s157, 8
      %s159 = scalar_lea.vmem %s3, %s158
      %p160 = scmp.lt.s32.totalorder %s14, 1
      %s161 = scalar_select %p160, %s14, 1
      %s162 = smul.addr %s161, 3
      %s163 = smul.addr %s162, 4
      %s164 = scalar_lea.vmem %s0, %s163
      %p165 = scmp.lt.s32.totalorder %s14, 1
      %s166 = scalar_select %p165, %s14, 1
      %s167 = smul.addr %s166, 8
      %s168 = scalar_lea.vmem %s3, %s167
      %v169 = vld [vmem:[%s164] sm:$0xff]
      %v170 = vld [vmem:[%s164 + $0x8] sm:$0xf]
      %v171 = vld [vmem:[%s1] sm:$0xff]
      %173 = vrot.lane.b32.xlu0 %v171, 124
      %v174 = vpop.permute.xlu0 %173
      %v177 = vcombine.high %v169, %v169
      %178 = vrot.lane.b32.xlu0 %v169, 127
      %v179 = vpop.permute.xlu0 %178
      %180 = vrot.lane.b32.xlu0 %v177, 127
      %v181 = vpop.permute.xlu0 %180
      %182 = vrot.lane.b32.xlu0 %v170, 127
      %v183 = vpop.permute.xlu0 %182
      %vm184 = vcmask 1039360
      %v185 = vsel %vm184, %v179, %v181
      %v186 = vsel %vm184, %v181, %v183
      %vm187 = vcmask 31744
      %v188 = vsel %vm187, %v174, 0
      %vm190 = vcmask 1043456
      %v191 = vsel %vm190, %v185, 0
      %v193 = vsel %vm190, %v186, 0
      %195 = vmatprep.subr.mxu0 %v193
      %196 = vmatpush1.msra.mxu0 %v191
      %197 = vmatprep.subr.mxu0 0.0
      %198 = vmatpush1.msra.mxu0 0.0
      %199 = vmatprep.subr.mxu0 0.0
      %200 = vmatpush1.msra.mxu0 0.0
      %201 = vmatprep.subr.mxu0 0.0
      %202 = vmatpush1.msra.mxu0 0.0
      %203 = vmatprep.subr.mxu0 0.0
      %204 = vmatpush1.msra.mxu0 0.0
      %205 = vmatprep.subr.mxu0 0.0
      %206 = vmatpush1.msra.mxu0 0.0
      %207 = vmatprep.subr.mxu0 0.0
      %208 = vmatpush1.msra.mxu0 0.0
      %209 = vmatprep.subr.mxu0 0.0
      %210 = vmatpush1.msra.mxu0 0.0
      %211 = vmatprep.subr.mxu0 0.0
      %212 = vmatpush1.msra.mxu0 0.0
      %213 = vmatprep.subr.mxu0 0.0
      %214 = vmatpush1.msra.mxu0 0.0
      %215 = vmatprep.subr.mxu0 0.0
      %216 = vmatpush1.msra.mxu0 0.0
      %217 = vmatprep.subr.mxu0 0.0
      %218 = vmatpush1.msra.mxu0 0.0
      %219 = vmatprep.subr.mxu0 0.0
      %220 = vmatpush1.msra.mxu0 0.0
      %221 = vmatprep.subr.mxu0 0.0
      %222 = vmatpush1.msra.mxu0 0.0
      %223 = vmatprep.subr.mxu0 0.0
      %224 = vmatpush1.msra.mxu0 0.0
      %225 = vmatprep.subr.mxu0 0.0
      %226 = vmatpush1.msra.mxu0 0.0
      %227 = vmatprep.subr.mxu0 0.0
      %228 = vmatpush1.msra.mxu0 0.0
      %229 = vmatprep.subr.mxu0 0.0
      %230 = vmatpush1.msra.mxu0 0.0
      %231 = vmatprep.subr.mxu0 0.0
      %232 = vmatpush1.msra.mxu0 0.0
      %233 = vmatprep.subr.mxu0 0.0
      %234 = vmatpush1.msra.mxu0 0.0
      %235 = vmatprep.subr.mxu0 0.0
      %236 = vmatpush1.msra.mxu0 0.0
      %237 = vmatprep.subr.mxu0 0.0
      %238 = vmatpush1.msra.mxu0 0.0
      %239 = vmatprep.subr.mxu0 0.0
      %240 = vmatpush1.msra.mxu0 0.0
      %241 = vmatprep.subr.mxu0 0.0
      %242 = vmatpush1.msra.mxu0 0.0
      %243 = vmatprep.subr.mxu0 0.0
      %244 = vmatpush1.msra.mxu0 0.0
      %245 = vmatprep.subr.mxu0 0.0
      %246 = vmatpush1.msra.mxu0 0.0
      %247 = vmatprep.subr.mxu0 0.0
      %248 = vmatpush1.msra.mxu0 0.0
      %249 = vmatprep.subr.mxu0 0.0
      %250 = vmatpush1.msra.mxu0 0.0
      %251 = vmatprep.subr.mxu0 0.0
      %252 = vmatpush1.msra.mxu0 0.0
      %253 = vmatprep.subr.mxu0 0.0
      %254 = vmatpush1.msra.mxu0 0.0
      %255 = vmatprep.subr.mxu0 0.0
      %256 = vmatpush1.msra.mxu0 0.0
      %257 = vmatprep.subr.mxu0 0.0
      %258 = vmatpush1.msra.mxu0 0.0
      %259 = vmatprep.mubr.f32.mxu0 0.0
      %260 = vmatmul.mubr.f32.gmra.mrb[0].mxu0 %v188
      %v261 = vpop.f32.mrb[0].mxu0
      %v262 = vadd.f32 0.0, %v261
      %v263 = vpop.f32.mrb[0].mxu0
      %v264 = vadd.f32 0.0, %v263
      %265 = vdwg.mxu0
      %v266 = vsel %vm187, %v171, 0
      %v268 = vsel %vm190, %v169, 0
      %v270 = vsel %vm190, %v177, 0
      %272 = vmatprep.subr.mxu0 %v270
      %273 = vmatpush1.msra.mxu0 %v268
      %274 = vmatprep.subr.mxu0 0.0
      %275 = vmatpush1.msra.mxu0 0.0
      %276 = vmatprep.subr.mxu0 0.0
      %277 = vmatpush1.msra.mxu0 0.0
      %278 = vmatprep.subr.mxu0 0.0
      %279 = vmatpush1.msra.mxu0 0.0
      %280 = vmatprep.subr.mxu0 0.0
      %281 = vmatpush1.msra.mxu0 0.0
      %282 = vmatprep.subr.mxu0 0.0
      %283 = vmatpush1.msra.mxu0 0.0
      %284 = vmatprep.subr.mxu0 0.0
      %285 = vmatpush1.msra.mxu0 0.0
      %286 = vmatprep.subr.mxu0 0.0
      %287 = vmatpush1.msra.mxu0 0.0
      %288 = vmatprep.subr.mxu0 0.0
      %289 = vmatpush1.msra.mxu0 0.0
      %290 = vmatprep.subr.mxu0 0.0
      %291 = vmatpush1.msra.mxu0 0.0
      %292 = vmatprep.subr.mxu0 0.0
      %293 = vmatpush1.msra.mxu0 0.0
      %294 = vmatprep.subr.mxu0 0.0
      %295 = vmatpush1.msra.mxu0 0.0
      %296 = vmatprep.subr.mxu0 0.0
      %297 = vmatpush1.msra.mxu0 0.0
      %298 = vmatprep.subr.mxu0 0.0
      %299 = vmatpush1.msra.mxu0 0.0
      %300 = vmatprep.subr.mxu0 0.0
      %301 = vmatpush1.msra.mxu0 0.0
      %302 = vmatprep.subr.mxu0 0.0
      %303 = vmatpush1.msra.mxu0 0.0
      %304 = vmatprep.subr.mxu0 0.0
      %305 = vmatpush1.msra.mxu0 0.0
      %306 = vmatprep.subr.mxu0 0.0
      %307 = vmatpush1.msra.mxu0 0.0
      %308 = vmatprep.subr.mxu0 0.0
      %309 = vmatpush1.msra.mxu0 0.0
      %310 = vmatprep.subr.mxu0 0.0
      %311 = vmatpush1.msra.mxu0 0.0
      %312 = vmatprep.subr.mxu0 0.0
      %313 = vmatpush1.msra.mxu0 0.0
      %314 = vmatprep.subr.mxu0 0.0
      %315 = vmatpush1.msra.mxu0 0.0
      %316 = vmatprep.subr.mxu0 0.0
      %317 = vmatpush1.msra.mxu0 0.0
      %318 = vmatprep.subr.mxu0 0.0
      %319 = vmatpush1.msra.mxu0 0.0
      %320 = vmatprep.subr.mxu0 0.0
      %321 = vmatpush1.msra.mxu0 0.0
      %322 = vmatprep.subr.mxu0 0.0
      %323 = vmatpush1.msra.mxu0 0.0
      %324 = vmatprep.subr.mxu0 0.0
      %325 = vmatpush1.msra.mxu0 0.0
      %326 = vmatprep.subr.mxu0 0.0
      %327 = vmatpush1.msra.mxu0 0.0
      %328 = vmatprep.subr.mxu0 0.0
      %329 = vmatpush1.msra.mxu0 0.0
      %330 = vmatprep.subr.mxu0 0.0
      %331 = vmatpush1.msra.mxu0 0.0
      %332 = vmatprep.subr.mxu0 0.0
      %333 = vmatpush1.msra.mxu0 0.0
      %334 = vmatprep.subr.mxu0 0.0
      %335 = vmatpush1.msra.mxu0 0.0
      %336 = vmatprep.mubr.f32.mxu0 0.0
      %337 = vmatmul.mubr.f32.gmra.mrb[0].mxu0 %v266
      %v338 = vpop.f32.mrb[0].mxu0
      %v339 = vadd.f32 %v262, %v338
      %v340 = vpop.f32.mrb[0].mxu0
      %v341 = vadd.f32 %v264, %v340
      %342 = vdwg.mxu0
      %343 = vrot.lane.b32.xlu0 %v171, 120
      %v344 = vpop.permute.xlu0 %343
      %345 = vrot.lane.b32.xlu0 %v169, 126
      %v346 = vpop.permute.xlu0 %345
      %347 = vrot.lane.b32.xlu0 %v177, 126
      %v348 = vpop.permute.xlu0 %347
      %349 = vrot.lane.b32.xlu0 %v170, 126
      %v350 = vpop.permute.xlu0 %349
      %vm351 = vcmask 1031168
      %v352 = vsel %vm351, %v346, %v348
      %v353 = vsel %vm351, %v348, %v350
      %v354 = vsel %vm187, %v344, 0
      %v356 = vsel %vm190, %v352, 0
      %v358 = vsel %vm190, %v353, 0
      %360 = vmatprep.subr.mxu0 %v358
      %361 = vmatpush1.msra.mxu0 %v356
      %362 = vmatprep.subr.mxu0 0.0
      %363 = vmatpush1.msra.mxu0 0.0
      %364 = vmatprep.subr.mxu0 0.0
      %365 = vmatpush1.msra.mxu0 0.0
      %366 = vmatprep.subr.mxu0 0.0
      %367 = vmatpush1.msra.mxu0 0.0
      %368 = vmatprep.subr.mxu0 0.0
      %369 = vmatpush1.msra.mxu0 0.0
      %370 = vmatprep.subr.mxu0 0.0
      %371 = vmatpush1.msra.mxu0 0.0
      %372 = vmatprep.subr.mxu0 0.0
      %373 = vmatpush1.msra.mxu0 0.0
      %374 = vmatprep.subr.mxu0 0.0
      %375 = vmatpush1.msra.mxu0 0.0
      %376 = vmatprep.subr.mxu0 0.0
      %377 = vmatpush1.msra.mxu0 0.0
      %378 = vmatprep.subr.mxu0 0.0
      %379 = vmatpush1.msra.mxu0 0.0
      %380 = vmatprep.subr.mxu0 0.0
      %381 = vmatpush1.msra.mxu0 0.0
      %382 = vmatprep.subr.mxu0 0.0
      %383 = vmatpush1.msra.mxu0 0.0
      %384 = vmatprep.subr.mxu0 0.0
      %385 = vmatpush1.msra.mxu0 0.0
      %386 = vmatprep.subr.mxu0 0.0
      %387 = vmatpush1.msra.mxu0 0.0
      %388 = vmatprep.subr.mxu0 0.0
      %389 = vmatpush1.msra.mxu0 0.0
      %390 = vmatprep.subr.mxu0 0.0
      %391 = vmatpush1.msra.mxu0 0.0
      %392 = vmatprep.subr.mxu0 0.0
      %393 = vmatpush1.msra.mxu0 0.0
      %394 = vmatprep.subr.mxu0 0.0
      %395 = vmatpush1.msra.mxu0 0.0
      %396 = vmatprep.subr.mxu0 0.0
      %397 = vmatpush1.msra.mxu0 0.0
      %398 = vmatprep.subr.mxu0 0.0
      %399 = vmatpush1.msra.mxu0 0.0
      %400 = vmatprep.subr.mxu0 0.0
      %401 = vmatpush1.msra.mxu0 0.0
      %402 = vmatprep.subr.mxu0 0.0
      %403 = vmatpush1.msra.mxu0 0.0
      %404 = vmatprep.subr.mxu0 0.0
      %405 = vmatpush1.msra.mxu0 0.0
      %406 = vmatprep.subr.mxu0 0.0
      %407 = vmatpush1.msra.mxu0 0.0
      %408 = vmatprep.subr.mxu0 0.0
      %409 = vmatpush1.msra.mxu0 0.0
      %410 = vmatprep.subr.mxu0 0.0
      %411 = vmatpush1.msra.mxu0 0.0
      %412 = vmatprep.subr.mxu0 0.0
      %413 = vmatpush1.msra.mxu0 0.0
      %414 = vmatprep.subr.mxu0 0.0
      %415 = vmatpush1.msra.mxu0 0.0
      %416 = vmatprep.subr.mxu0 0.0
      %417 = vmatpush1.msra.mxu0 0.0
      %418 = vmatprep.subr.mxu0 0.0
      %419 = vmatpush1.msra.mxu0 0.0
      %420 = vmatprep.subr.mxu0 0.0
      %421 = vmatpush1.msra.mxu0 0.0
      %422 = vmatprep.subr.mxu0 0.0
      %423 = vmatpush1.msra.mxu0 0.0
      %424 = vmatprep.mubr.f32.mxu0 0.0
      %425 = vmatmul.mubr.f32.gmra.mrb[0].mxu0 %v354
      %v426 = vpop.f32.mrb[0].mxu0
      %v427 = vadd.f32 0.0, %v426
      %v428 = vpop.f32.mrb[0].mxu0
      %v429 = vadd.f32 0.0, %v428
      %430 = vdwg.mxu0
      %v431 = vadd.f32 %v339, %v427
      %v432 = vadd.f32 %v341, %v429
      %433 = vrot.lane.b32.xlu0 %v171, 116
      %v434 = vpop.permute.xlu0 %433
      %435 = vrot.lane.b32.xlu0 %v169, 112
      %v436 = vpop.permute.xlu0 %435
      %437 = vrot.lane.b32.xlu0 %v177, 112
      %v438 = vpop.permute.xlu0 %437
      %439 = vrot.lane.b32.xlu0 %v170, 112
      %v440 = vpop.permute.xlu0 %439
      %vm441 = vcmask 916480
      %v442 = vsel %vm441, %v436, %v438
      %v443 = vsel %vm441, %v438, %v440
      %v444 = vsel %vm187, %v434, 0
      %v446 = vsel %vm190, %v442, 0
      %v448 = vsel %vm190, %v443, 0
      %450 = vmatprep.subr.mxu0 %v448
      %451 = vmatpush1.msra.mxu0 %v446
      %452 = vmatprep.subr.mxu0 0.0
      %453 = vmatpush1.msra.mxu0 0.0
      %454 = vmatprep.subr.mxu0 0.0
      %455 = vmatpush1.msra.mxu0 0.0
      %456 = vmatprep.subr.mxu0 0.0
      %457 = vmatpush1.msra.mxu0 0.0
      %458 = vmatprep.subr.mxu0 0.0
      %459 = vmatpush1.msra.mxu0 0.0
      %460 = vmatprep.subr.mxu0 0.0
      %461 = vmatpush1.msra.mxu0 0.0
      %462 = vmatprep.subr.mxu0 0.0
      %463 = vmatpush1.msra.mxu0 0.0
      %464 = vmatprep.subr.mxu0 0.0
      %465 = vmatpush1.msra.mxu0 0.0
      %466 = vmatprep.subr.mxu0 0.0
      %467 = vmatpush1.msra.mxu0 0.0
      %468 = vmatprep.subr.mxu0 0.0
      %469 = vmatpush1.msra.mxu0 0.0
      %470 = vmatprep.subr.mxu0 0.0
      %471 = vmatpush1.msra.mxu0 0.0
      %472 = vmatprep.subr.mxu0 0.0
      %473 = vmatpush1.msra.mxu0 0.0
      %474 = vmatprep.subr.mxu0 0.0
      %475 = vmatpush1.msra.mxu0 0.0
      %476 = vmatprep.subr.mxu0 0.0
      %477 = vmatpush1.msra.mxu0 0.0
      %478 = vmatprep.subr.mxu0 0.0
      %479 = vmatpush1.msra.mxu0 0.0
      %480 = vmatprep.subr.mxu0 0.0
      %481 = vmatpush1.msra.mxu0 0.0
      %482 = vmatprep.subr.mxu0 0.0
      %483 = vmatpush1.msra.mxu0 0.0
      %484 = vmatprep.subr.mxu0 0.0
      %485 = vmatpush1.msra.mxu0 0.0
      %486 = vmatprep.subr.mxu0 0.0
      %487 = vmatpush1.msra.mxu0 0.0
      %488 = vmatprep.subr.mxu0 0.0
      %489 = vmatpush1.msra.mxu0 0.0
      %490 = vmatprep.subr.mxu0 0.0
      %491 = vmatpush1.msra.mxu0 0.0
      %492 = vmatprep.subr.mxu0 0.0
      %493 = vmatpush1.msra.mxu0 0.0
      %494 = vmatprep.subr.mxu0 0.0
      %495 = vmatpush1.msra.mxu0 0.0
      %496 = vmatprep.subr.mxu0 0.0
      %497 = vmatpush1.msra.mxu0 0.0
      %498 = vmatprep.subr.mxu0 0.0
      %499 = vmatpush1.msra.mxu0 0.0
      %500 = vmatprep.subr.mxu0 0.0
      %501 = vmatpush1.msra.mxu0 0.0
      %502 = vmatprep.subr.mxu0 0.0
      %503 = vmatpush1.msra.mxu0 0.0
      %504 = vmatprep.subr.mxu0 0.0
      %505 = vmatpush1.msra.mxu0 0.0
      %506 = vmatprep.subr.mxu0 0.0
      %507 = vmatpush1.msra.mxu0 0.0
      %508 = vmatprep.subr.mxu0 0.0
      %509 = vmatpush1.msra.mxu0 0.0
      %510 = vmatprep.subr.mxu0 0.0
      %511 = vmatpush1.msra.mxu0 0.0
      %512 = vmatprep.subr.mxu0 0.0
      %513 = vmatpush1.msra.mxu0 0.0
      %514 = vmatprep.mubr.f32.mxu0 0.0
      %515 = vmatmul.mubr.f32.gmra.mrb[0].mxu0 %v444
      %v516 = vpop.f32.mrb[0].mxu0
      %v517 = vadd.f32 0.0, %v516
      %v518 = vpop.f32.mrb[0].mxu0
      %v519 = vadd.f32 0.0, %v518
      %520 = vdwg.mxu0
      %v521 = vadd.f32 %v431, %v517
      %v522 = vadd.f32 %v432, %v519
      %523 = vrot.lane.b32.xlu0 %v171, 112
      %v524 = vpop.permute.xlu0 %523
      %525 = vrot.lane.b32.xlu0 %v169, 111
      %v526 = vpop.permute.xlu0 %525
      %527 = vrot.lane.b32.xlu0 %v177, 111
      %v528 = vpop.permute.xlu0 %527
      %529 = vrot.lane.b32.xlu0 %v170, 111
      %v530 = vpop.permute.xlu0 %529
      %vm531 = vcmask 908288
      %v532 = vsel %vm531, %v526, %v528
      %v533 = vsel %vm531, %v528, %v530
      %v534 = vsel %vm187, %v524, 0
      %v536 = vsel %vm190, %v532, 0
      %v538 = vsel %vm190, %v533, 0
      %540 = vmatprep.subr.mxu0 %v538
      %541 = vmatpush1.msra.mxu0 %v536
      %542 = vmatprep.subr.mxu0 0.0
      %543 = vmatpush1.msra.mxu0 0.0
      %544 = vmatprep.subr.mxu0 0.0
      %545 = vmatpush1.msra.mxu0 0.0
      %546 = vmatprep.subr.mxu0 0.0
      %547 = vmatpush1.msra.mxu0 0.0
      %548 = vmatprep.subr.mxu0 0.0
      %549 = vmatpush1.msra.mxu0 0.0
      %550 = vmatprep.subr.mxu0 0.0
      %551 = vmatpush1.msra.mxu0 0.0
      %552 = vmatprep.subr.mxu0 0.0
      %553 = vmatpush1.msra.mxu0 0.0
      %554 = vmatprep.subr.mxu0 0.0
      %555 = vmatpush1.msra.mxu0 0.0
      %556 = vmatprep.subr.mxu0 0.0
      %557 = vmatpush1.msra.mxu0 0.0
      %558 = vmatprep.subr.mxu0 0.0
      %559 = vmatpush1.msra.mxu0 0.0
      %560 = vmatprep.subr.mxu0 0.0
      %561 = vmatpush1.msra.mxu0 0.0
      %562 = vmatprep.subr.mxu0 0.0
      %563 = vmatpush1.msra.mxu0 0.0
      %564 = vmatprep.subr.mxu0 0.0
      %565 = vmatpush1.msra.mxu0 0.0
      %566 = vmatprep.subr.mxu0 0.0
      %567 = vmatpush1.msra.mxu0 0.0
      %568 = vmatprep.subr.mxu0 0.0
      %569 = vmatpush1.msra.mxu0 0.0
      %570 = vmatprep.subr.mxu0 0.0
      %571 = vmatpush1.msra.mxu0 0.0
      %572 = vmatprep.subr.mxu0 0.0
      %573 = vmatpush1.msra.mxu0 0.0
      %574 = vmatprep.subr.mxu0 0.0
      %575 = vmatpush1.msra.mxu0 0.0
      %576 = vmatprep.subr.mxu0 0.0
      %577 = vmatpush1.msra.mxu0 0.0
      %578 = vmatprep.subr.mxu0 0.0
      %579 = vmatpush1.msra.mxu0 0.0
      %580 = vmatprep.subr.mxu0 0.0
      %581 = vmatpush1.msra.mxu0 0.0
      %582 = vmatprep.subr.mxu0 0.0
      %583 = vmatpush1.msra.mxu0 0.0
      %584 = vmatprep.subr.mxu0 0.0
      %585 = vmatpush1.msra.mxu0 0.0
      %586 = vmatprep.subr.mxu0 0.0
      %587 = vmatpush1.msra.mxu0 0.0
      %588 = vmatprep.subr.mxu0 0.0
      %589 = vmatpush1.msra.mxu0 0.0
      %590 = vmatprep.subr.mxu0 0.0
      %591 = vmatpush1.msra.mxu0 0.0
      %592 = vmatprep.subr.mxu0 0.0
      %593 = vmatpush1.msra.mxu0 0.0
      %594 = vmatprep.subr.mxu0 0.0
      %595 = vmatpush1.msra.mxu0 0.0
      %596 = vmatprep.subr.mxu0 0.0
      %597 = vmatpush1.msra.mxu0 0.0
      %598 = vmatprep.subr.mxu0 0.0
      %599 = vmatpush1.msra.mxu0 0.0
      %600 = vmatprep.subr.mxu0 0.0
      %601 = vmatpush1.msra.mxu0 0.0
      %602 = vmatprep.subr.mxu0 0.0
      %603 = vmatpush1.msra.mxu0 0.0
      %604 = vmatprep.mubr.f32.mxu0 0.0
      %605 = vmatmul.mubr.f32.gmra.mrb[0].mxu0 %v534
      %v606 = vpop.f32.mrb[0].mxu0
      %v607 = vadd.f32 0.0, %v606
      %v608 = vpop.f32.mrb[0].mxu0
      %v609 = vadd.f32 0.0, %v608
      %610 = vdwg.mxu0
      %v611 = vadd.f32 %v521, %v607
      %v612 = vadd.f32 %v522, %v609
      %613 = vrot.lane.b32.xlu0 %v171, 108
      %v614 = vpop.permute.xlu0 %613
      %615 = vrot.lane.b32.xlu0 %v169, 110
      %v616 = vpop.permute.xlu0 %615
      %617 = vrot.lane.b32.xlu0 %v177, 110
      %v618 = vpop.permute.xlu0 %617
      %619 = vrot.lane.b32.xlu0 %v170, 110
      %v620 = vpop.permute.xlu0 %619
      %vm621 = vcmask 900096
      %v622 = vsel %vm621, %v616, %v618
      %v623 = vsel %vm621, %v618, %v620
      %v624 = vsel %vm187, %v614, 0
      %v626 = vsel %vm190, %v622, 0
      %v628 = vsel %vm190, %v623, 0
      %630 = vmatprep.subr.mxu0 %v628
      %631 = vmatpush1.msra.mxu0 %v626
      %632 = vmatprep.subr.mxu0 0.0
      %633 = vmatpush1.msra.mxu0 0.0
      %634 = vmatprep.subr.mxu0 0.0
      %635 = vmatpush1.msra.mxu0 0.0
      %636 = vmatprep.subr.mxu0 0.0
      %637 = vmatpush1.msra.mxu0 0.0
      %638 = vmatprep.subr.mxu0 0.0
      %639 = vmatpush1.msra.mxu0 0.0
      %640 = vmatprep.subr.mxu0 0.0
      %641 = vmatpush1.msra.mxu0 0.0
      %642 = vmatprep.subr.mxu0 0.0
      %643 = vmatpush1.msra.mxu0 0.0
      %644 = vmatprep.subr.mxu0 0.0
      %645 = vmatpush1.msra.mxu0 0.0
      %646 = vmatprep.subr.mxu0 0.0
      %647 = vmatpush1.msra.mxu0 0.0
      %648 = vmatprep.subr.mxu0 0.0
      %649 = vmatpush1.msra.mxu0 0.0
      %650 = vmatprep.subr.mxu0 0.0
      %651 = vmatpush1.msra.mxu0 0.0
      %652 = vmatprep.subr.mxu0 0.0
      %653 = vmatpush1.msra.mxu0 0.0
      %654 = vmatprep.subr.mxu0 0.0
      %655 = vmatpush1.msra.mxu0 0.0
      %656 = vmatprep.subr.mxu0 0.0
      %657 = vmatpush1.msra.mxu0 0.0
      %658 = vmatprep.subr.mxu0 0.0
      %659 = vmatpush1.msra.mxu0 0.0
      %660 = vmatprep.subr.mxu0 0.0
      %661 = vmatpush1.msra.mxu0 0.0
      %662 = vmatprep.subr.mxu0 0.0
      %663 = vmatpush1.msra.mxu0 0.0
      %664 = vmatprep.subr.mxu0 0.0
      %665 = vmatpush1.msra.mxu0 0.0
      %666 = vmatprep.subr.mxu0 0.0
      %667 = vmatpush1.msra.mxu0 0.0
      %668 = vmatprep.subr.mxu0 0.0
      %669 = vmatpush1.msra.mxu0 0.0
      %670 = vmatprep.subr.mxu0 0.0
      %671 = vmatpush1.msra.mxu0 0.0
      %672 = vmatprep.subr.mxu0 0.0
      %673 = vmatpush1.msra.mxu0 0.0
      %674 = vmatprep.subr.mxu0 0.0
      %675 = vmatpush1.msra.mxu0 0.0
      %676 = vmatprep.subr.mxu0 0.0
      %677 = vmatpush1.msra.mxu0 0.0
      %678 = vmatprep.subr.mxu0 0.0
      %679 = vmatpush1.msra.mxu0 0.0
      %680 = vmatprep.subr.mxu0 0.0
      %681 = vmatpush1.msra.mxu0 0.0
      %682 = vmatprep.subr.mxu0 0.0
      %683 = vmatpush1.msra.mxu0 0.0
      %684 = vmatprep.subr.mxu0 0.0
      %685 = vmatpush1.msra.mxu0 0.0
      %686 = vmatprep.subr.mxu0 0.0
      %687 = vmatpush1.msra.mxu0 0.0
      %688 = vmatprep.subr.mxu0 0.0
      %689 = vmatpush1.msra.mxu0 0.0
      %690 = vmatprep.subr.mxu0 0.0
      %691 = vmatpush1.msra.mxu0 0.0
      %692 = vmatprep.subr.mxu0 0.0
      %693 = vmatpush1.msra.mxu0 0.0
      %694 = vmatprep.mubr.f32.mxu0 0.0
      %695 = vmatmul.mubr.f32.gmra.mrb[0].mxu0 %v624
      %v696 = vpop.f32.mrb[0].mxu0
      %v697 = vadd.f32 0.0, %v696
      %v698 = vpop.f32.mrb[0].mxu0
      %v699 = vadd.f32 0.0, %v698
      %700 = vdwg.mxu0
      %v701 = vadd.f32 %v611, %v697
      %v702 = vadd.f32 %v612, %v699
      %703 = vrot.lane.b32.xlu0 %v171, 104
      %v704 = vpop.permute.xlu0 %703
      %705 = vrot.lane.b32.xlu0 %v169, 96
      %v706 = vpop.permute.xlu0 %705
      %707 = vrot.lane.b32.xlu0 %v177, 96
      %v708 = vpop.permute.xlu0 %707
      %709 = vrot.lane.b32.xlu0 %v170, 96
      %v710 = vpop.permute.xlu0 %709
      %vm711 = vcmask 785408
      %v712 = vsel %vm711, %v706, %v708
      %v713 = vsel %vm711, %v708, %v710
      %v714 = vsel %vm187, %v704, 0
      %v716 = vsel %vm190, %v712, 0
      %v718 = vsel %vm190, %v713, 0
      %720 = vmatprep.subr.mxu0 %v718
      %721 = vmatpush1.msra.mxu0 %v716
      %722 = vmatprep.subr.mxu0 0.0
      %723 = vmatpush1.msra.mxu0 0.0
      %724 = vmatprep.subr.mxu0 0.0
      %725 = vmatpush1.msra.mxu0 0.0
      %726 = vmatprep.subr.mxu0 0.0
      %727 = vmatpush1.msra.mxu0 0.0
      %728 = vmatprep.subr.mxu0 0.0
      %729 = vmatpush1.msra.mxu0 0.0
      %730 = vmatprep.subr.mxu0 0.0
      %731 = vmatpush1.msra.mxu0 0.0
      %732 = vmatprep.subr.mxu0 0.0
      %733 = vmatpush1.msra.mxu0 0.0
      %734 = vmatprep.subr.mxu0 0.0
      %735 = vmatpush1.msra.mxu0 0.0
      %736 = vmatprep.subr.mxu0 0.0
      %737 = vmatpush1.msra.mxu0 0.0
      %738 = vmatprep.subr.mxu0 0.0
      %739 = vmatpush1.msra.mxu0 0.0
      %740 = vmatprep.subr.mxu0 0.0
      %741 = vmatpush1.msra.mxu0 0.0
      %742 = vmatprep.subr.mxu0 0.0
      %743 = vmatpush1.msra.mxu0 0.0
      %744 = vmatprep.subr.mxu0 0.0
      %745 = vmatpush1.msra.mxu0 0.0
      %746 = vmatprep.subr.mxu0 0.0
      %747 = vmatpush1.msra.mxu0 0.0
      %748 = vmatprep.subr.mxu0 0.0
      %749 = vmatpush1.msra.mxu0 0.0
      %750 = vmatprep.subr.mxu0 0.0
      %751 = vmatpush1.msra.mxu0 0.0
      %752 = vmatprep.subr.mxu0 0.0
      %753 = vmatpush1.msra.mxu0 0.0
      %754 = vmatprep.subr.mxu0 0.0
      %755 = vmatpush1.msra.mxu0 0.0
      %756 = vmatprep.subr.mxu0 0.0
      %757 = vmatpush1.msra.mxu0 0.0
      %758 = vmatprep.subr.mxu0 0.0
      %759 = vmatpush1.msra.mxu0 0.0
      %760 = vmatprep.subr.mxu0 0.0
      %761 = vmatpush1.msra.mxu0 0.0
      %762 = vmatprep.subr.mxu0 0.0
      %763 = vmatpush1.msra.mxu0 0.0
      %764 = vmatprep.subr.mxu0 0.0
      %765 = vmatpush1.msra.mxu0 0.0
      %766 = vmatprep.subr.mxu0 0.0
      %767 = vmatpush1.msra.mxu0 0.0
      %768 = vmatprep.subr.mxu0 0.0
      %769 = vmatpush1.msra.mxu0 0.0
      %770 = vmatprep.subr.mxu0 0.0
      %771 = vmatpush1.msra.mxu0 0.0
      %772 = vmatprep.subr.mxu0 0.0
      %773 = vmatpush1.msra.mxu0 0.0
      %774 = vmatprep.subr.mxu0 0.0
      %775 = vmatpush1.msra.mxu0 0.0
      %776 = vmatprep.subr.mxu0 0.0
      %777 = vmatpush1.msra.mxu0 0.0
      %778 = vmatprep.subr.mxu0 0.0
      %779 = vmatpush1.msra.mxu0 0.0
      %780 = vmatprep.subr.mxu0 0.0
      %781 = vmatpush1.msra.mxu0 0.0
      %782 = vmatprep.subr.mxu0 0.0
      %783 = vmatpush1.msra.mxu0 0.0
      %784 = vmatprep.mubr.f32.mxu0 0.0
      %785 = vmatmul.mubr.f32.gmra.mrb[0].mxu0 %v714
      %v786 = vpop.f32.mrb[0].mxu0
      %v787 = vadd.f32 0.0, %v786
      %v788 = vpop.f32.mrb[0].mxu0
      %v789 = vadd.f32 0.0, %v788
      %790 = vdwg.mxu0
      %v791 = vadd.f32 %v701, %v787
      %v792 = vadd.f32 %v702, %v789
      %793 = vrot.lane.b32.xlu0 %v171, 100
      %v794 = vpop.permute.xlu0 %793
      %795 = vrot.lane.b32.xlu0 %v169, 95
      %v796 = vpop.permute.xlu0 %795
      %797 = vrot.lane.b32.xlu0 %v177, 95
      %v798 = vpop.permute.xlu0 %797
      %799 = vrot.lane.b32.xlu0 %v170, 95
      %v800 = vpop.permute.xlu0 %799
      %vm801 = vcmask 777216
      %v802 = vsel %vm801, %v796, %v798
      %v803 = vsel %vm801, %v798, %v800
      %v804 = vsel %vm187, %v794, 0
      %v806 = vsel %vm190, %v802, 0
      %v808 = vsel %vm190, %v803, 0
      %810 = vmatprep.subr.mxu0 %v808
      %811 = vmatpush1.msra.mxu0 %v806
      %812 = vmatprep.subr.mxu0 0.0
      %813 = vmatpush1.msra.mxu0 0.0
      %814 = vmatprep.subr.mxu0 0.0
      %815 = vmatpush1.msra.mxu0 0.0
      %816 = vmatprep.subr.mxu0 0.0
      %817 = vmatpush1.msra.mxu0 0.0
      %818 = vmatprep.subr.mxu0 0.0
      %819 = vmatpush1.msra.mxu0 0.0
      %820 = vmatprep.subr.mxu0 0.0
      %821 = vmatpush1.msra.mxu0 0.0
      %822 = vmatprep.subr.mxu0 0.0
      %823 = vmatpush1.msra.mxu0 0.0
      %824 = vmatprep.subr.mxu0 0.0
      %825 = vmatpush1.msra.mxu0 0.0
      %826 = vmatprep.subr.mxu0 0.0
      %827 = vmatpush1.msra.mxu0 0.0
      %828 = vmatprep.subr.mxu0 0.0
      %829 = vmatpush1.msra.mxu0 0.0
      %830 = vmatprep.subr.mxu0 0.0
      %831 = vmatpush1.msra.mxu0 0.0
      %832 = vmatprep.subr.mxu0 0.0
      %833 = vmatpush1.msra.mxu0 0.0
      %834 = vmatprep.subr.mxu0 0.0
      %835 = vmatpush1.msra.mxu0 0.0
      %836 = vmatprep.subr.mxu0 0.0
      %837 = vmatpush1.msra.mxu0 0.0
      %838 = vmatprep.subr.mxu0 0.0
      %839 = vmatpush1.msra.mxu0 0.0
      %840 = vmatprep.subr.mxu0 0.0
      %841 = vmatpush1.msra.mxu0 0.0
      %842 = vmatprep.subr.mxu0 0.0
      %843 = vmatpush1.msra.mxu0 0.0
      %844 = vmatprep.subr.mxu0 0.0
      %845 = vmatpush1.msra.mxu0 0.0
      %846 = vmatprep.subr.mxu0 0.0
      %847 = vmatpush1.msra.mxu0 0.0
      %848 = vmatprep.subr.mxu0 0.0
      %849 = vmatpush1.msra.mxu0 0.0
      %850 = vmatprep.subr.mxu0 0.0
      %851 = vmatpush1.msra.mxu0 0.0
      %852 = vmatprep.subr.mxu0 0.0
      %853 = vmatpush1.msra.mxu0 0.0
      %854 = vmatprep.subr.mxu0 0.0
      %855 = vmatpush1.msra.mxu0 0.0
      %856 = vmatprep.subr.mxu0 0.0
      %857 = vmatpush1.msra.mxu0 0.0
      %858 = vmatprep.subr.mxu0 0.0
      %859 = vmatpush1.msra.mxu0 0.0
      %860 = vmatprep.subr.mxu0 0.0
      %861 = vmatpush1.msra.mxu0 0.0
      %862 = vmatprep.subr.mxu0 0.0
      %863 = vmatpush1.msra.mxu0 0.0
      %864 = vmatprep.subr.mxu0 0.0
      %865 = vmatpush1.msra.mxu0 0.0
      %866 = vmatprep.subr.mxu0 0.0
      %867 = vmatpush1.msra.mxu0 0.0
      %868 = vmatprep.subr.mxu0 0.0
      %869 = vmatpush1.msra.mxu0 0.0
      %870 = vmatprep.subr.mxu0 0.0
      %871 = vmatpush1.msra.mxu0 0.0
      %872 = vmatprep.subr.mxu0 0.0
      %873 = vmatpush1.msra.mxu0 0.0
      %874 = vmatprep.mubr.f32.mxu0 0.0
      %875 = vmatmul.mubr.f32.gmra.mrb[0].mxu0 %v804
      %v876 = vpop.f32.mrb[0].mxu0
      %v877 = vadd.f32 0.0, %v876
      %v878 = vpop.f32.mrb[0].mxu0
      %v879 = vadd.f32 0.0, %v878
      %880 = vdwg.mxu0
      %v881 = vadd.f32 %v791, %v877
      %v882 = vadd.f32 %v792, %v879
      %883 = vrot.lane.b32.xlu0 %v171, 96
      %v884 = vpop.permute.xlu0 %883
      %885 = vrot.lane.b32.xlu0 %v169, 94
      %v886 = vpop.permute.xlu0 %885
      %887 = vrot.lane.b32.xlu0 %v177, 94
      %v888 = vpop.permute.xlu0 %887
      %889 = vrot.lane.b32.xlu0 %v170, 94
      %v890 = vpop.permute.xlu0 %889
      %vm891 = vcmask 769024
      %v892 = vsel %vm891, %v886, %v888
      %v893 = vsel %vm891, %v888, %v890
      %v894 = vsel %vm187, %v884, 0
      %v896 = vsel %vm190, %v892, 0
      %v898 = vsel %vm190, %v893, 0
      %900 = vmatprep.subr.mxu0 %v898
      %901 = vmatpush1.msra.mxu0 %v896
      %902 = vmatprep.subr.mxu0 0.0
      %903 = vmatpush1.msra.mxu0 0.0
      %904 = vmatprep.subr.mxu0 0.0
      %905 = vmatpush1.msra.mxu0 0.0
      %906 = vmatprep.subr.mxu0 0.0
      %907 = vmatpush1.msra.mxu0 0.0
      %908 = vmatprep.subr.mxu0 0.0
      %909 = vmatpush1.msra.mxu0 0.0
      %910 = vmatprep.subr.mxu0 0.0
      %911 = vmatpush1.msra.mxu0 0.0
      %912 = vmatprep.subr.mxu0 0.0
      %913 = vmatpush1.msra.mxu0 0.0
      %914 = vmatprep.subr.mxu0 0.0
      %915 = vmatpush1.msra.mxu0 0.0
      %916 = vmatprep.subr.mxu0 0.0
      %917 = vmatpush1.msra.mxu0 0.0
      %918 = vmatprep.subr.mxu0 0.0
      %919 = vmatpush1.msra.mxu0 0.0
      %920 = vmatprep.subr.mxu0 0.0
      %921 = vmatpush1.msra.mxu0 0.0
      %922 = vmatprep.subr.mxu0 0.0
      %923 = vmatpush1.msra.mxu0 0.0
      %924 = vmatprep.subr.mxu0 0.0
      %925 = vmatpush1.msra.mxu0 0.0
      %926 = vmatprep.subr.mxu0 0.0
      %927 = vmatpush1.msra.mxu0 0.0
      %928 = vmatprep.subr.mxu0 0.0
      %929 = vmatpush1.msra.mxu0 0.0
      %930 = vmatprep.subr.mxu0 0.0
      %931 = vmatpush1.msra.mxu0 0.0
      %932 = vmatprep.subr.mxu0 0.0
      %933 = vmatpush1.msra.mxu0 0.0
      %934 = vmatprep.subr.mxu0 0.0
      %935 = vmatpush1.msra.mxu0 0.0
      %936 = vmatprep.subr.mxu0 0.0
      %937 = vmatpush1.msra.mxu0 0.0
      %938 = vmatprep.subr.mxu0 0.0
      %939 = vmatpush1.msra.mxu0 0.0
      %940 = vmatprep.subr.mxu0 0.0
      %941 = vmatpush1.msra.mxu0 0.0
      %942 = vmatprep.subr.mxu0 0.0
      %943 = vmatpush1.msra.mxu0 0.0
      %944 = vmatprep.subr.mxu0 0.0
      %945 = vmatpush1.msra.mxu0 0.0
      %946 = vmatprep.subr.mxu0 0.0
      %947 = vmatpush1.msra.mxu0 0.0
      %948 = vmatprep.subr.mxu0 0.0
      %949 = vmatpush1.msra.mxu0 0.0
      %950 = vmatprep.subr.mxu0 0.0
      %951 = vmatpush1.msra.mxu0 0.0
      %952 = vmatprep.subr.mxu0 0.0
      %953 = vmatpush1.msra.mxu0 0.0
      %954 = vmatprep.subr.mxu0 0.0
      %955 = vmatpush1.msra.mxu0 0.0
      %956 = vmatprep.subr.mxu0 0.0
      %957 = vmatpush1.msra.mxu0 0.0
      %958 = vmatprep.subr.mxu0 0.0
      %959 = vmatpush1.msra.mxu0 0.0
      %960 = vmatprep.subr.mxu0 0.0
      %961 = vmatpush1.msra.mxu0 0.0
      %962 = vmatprep.subr.mxu0 0.0
      %963 = vmatpush1.msra.mxu0 0.0
      %964 = vmatprep.mubr.f32.mxu0 0.0
      %965 = vmatmul.mubr.f32.gmra.mrb[0].mxu0 %v894
      %v966 = vpop.f32.mrb[0].mxu0
      %v967 = vadd.f32 0.0, %v966
      %v968 = vpop.f32.mrb[0].mxu0
      %v969 = vadd.f32 0.0, %v968
      %970 = vdwg.mxu0
      %v971 = vadd.f32 %v881, %v967
      %v972 = vadd.f32 %v882, %v969
      %v973 = vld [vmem:[%s2] sm:$0x3]
      %v975 = vlaneseq
      %v976 = vshrl.u32 %v975, 7
      %v977 = vsub.s32 0, %v976
      %v978 = vrot.slane %v973, %v977
      %v979 = vlaneseq
      %v980 = vshrl.u32 %v979, 7
      %v981 = vsub.s32 1, %v980
      %v982 = vrot.slane %v973, %v981
      %v985 = vmul.f32 %v971, %v978
      %v986 = vmul.f32 %v972, %v982
      %v987 = vadd.f32 %v985, %v986
      %988 = vadd.xlane.f32.xlu0 %v987
      %v989 = vpop.xlane.xlu0 %988
      %vm990 = vcmask 7168
      %991 = vst.msk [vmem:[%s168] sm:$0xff] %vm990, %v989
      %v992 = vmul.f32 %v985, %v971
      %v993 = vmul.f32 %v986, %v972
      %v994 = vadd.f32 %v992, %v993
      %995 = vadd.xlane.f32.xlu0 %v994
      %v996 = vpop.xlane.xlu0 %995
      %vm997 = vcmask 15368
      %998 = vst.msk [vmem:[%s168] sm:$0xff] %vm997, %v996
      %p999 = scmp.lt.s32.totalorder %s14, 1
      %s1000 = scalar_select %p999, %s14, 1
      %s1001 = smul.addr %s1000, 8
      %s1002 = scalar_lea.vmem %s3, %s1001
      // Predicated region
      $region33: #{conv_block_forward.2} parent=31 // pred_check
        %p1003 = pneg %p100
      $region34: #{conv_block_forward.2} parent=31 // pred_check_branch
        %1005 = sbr.rel (%p1003) target = $region36
      $region35: #{conv_block_forward.2} parent=31 // pred_region
        _
      $region36: #{conv_block_forward.2} parent=31 // pred_fallthru
        _
    $region32: #{conv_block_forward.2} parent=5 // pred_fallthru
      _
    %p1006 = scmp.le.s32.totalorder 2, %s9
    // Predicated region
    $region37: #{conv_block_forward.2} parent=5 // pred_check
      %p1007 = pneg %p1006
    $region38: #{conv_block_forward.2} parent=5 // pred_check_branch
      %1009 = sbr.rel (%p1007) target = $region40
    $region39: #{conv_block_forward.2} parent=5 // pred_region
      %s1010 = ssub.s32 %s9, 2
      // Predicated region
      $region41: #{conv_block_forward.2} parent=39 // pred_check
        %p1011 = pneg %p106
      $region42: #{conv_block_forward.2} parent=39 // pred_check_branch
        %1013 = sbr.rel (%p1011) target = $region44
      $region43: #{conv_block_forward.2} parent=39 // pred_region
        %p1014 = scmp.lt.s32.totalorder %s15, 1
        %s1015 = scalar_select %p1014, %s15, 1
        %s1016 = smul.addr %s1015, 8
        %s1017 = scalar_lea.vmem %s3, %s1016
      $region44: #{conv_block_forward.2} parent=39 // pred_fallthru
        _
    $region40: #{conv_block_forward.2} parent=5 // pred_fallthru
      _
  $region6: #{conv_block_forward.2} parent=0 // loop_footer
    %s13 = sadd.s32 1, %s9
  $region7: #{conv_block_forward.2} parent=0 // loop_footer_branch
    %8 = sbr.rel target = $region3
  $region8: #{conv_block_forward.2} parent=0 // loop_exit
    _

</llo_original>
